<compile_context>
chip_gen: v7x
topology: tpu7x:2x2x1
jax: 0.10.0
libtpu: 0.0.40
codegen_flags: <defaults>
</compile_context>

<pallas_src>
import functools

import jax
import jax.numpy as jnp
from jax.experimental import pallas as pl
from jax.experimental.pallas import tpu as pltpu


def _mlp_kernel(xyt_ref, w1t_ref, b1t_ref, w2t_ref, b2t_ref, w3_ref, b3_ref,
                out_ref):
    # xyt: (3, TN) f32    w1t: (50, 3) f32   b1t: (50, 1) f32
    # w2t: (50, 50) bf16  b2t: (50, 1) f32   w3: (50, 1) f32   b3: (1, 1) SMEM
    # out: (1, TN) f32
    xyt = xyt_ref[...]
    w1t = w1t_ref[...]

    # Layer 1 on the VPU: three broadcast FMAs (outer products).
    z1 = (w1t[:, 0:1] * xyt[0:1, :]
          + w1t[:, 1:2] * xyt[1:2, :]
          + w1t[:, 2:3] * xyt[2:3, :]) + b1t_ref[...]
    h1 = jnp.tanh(z1)                                   # (50, TN) f32

    # Layer 2 on the MXU: bf16 operands, f32 accumulation, lane dim = TN.
    z2 = jnp.dot(w2t_ref[...], h1.astype(jnp.bfloat16),
                 preferred_element_type=jnp.float32)
    h2 = jnp.tanh(z2 + b2t_ref[...])                    # (50, TN) f32

    # Layer 3 on VPU + XLU: weighted sublane reduction instead of an N=1 matmul.
    out = jnp.sum(h2 * w3_ref[...], axis=0, keepdims=True) + b3_ref[0, 0]
    out_ref[...] = out.astype(out_ref.dtype)            # (1, TN) lane-dense store


@functools.partial(jax.jit, static_argnames=("tile_n",))
def pinn_2dwave_forward(x, y, t, params, *, tile_n=4096):
    """x, y, t: (N, 1) float32.  Returns (N, 1) float32."""
    w1, b1, w2, b2, w3, b3 = params
    n = x.shape[0]

    # Lane tile: multiple of 128; cap it so there are >= 2 grid steps whenever
    # the batch allows it (keeps both v7x TensorCores busy under "parallel").
    tn = max(128, (int(tile_n) // 128) * 128)
    if n > 128:
        cap = ((pl.cdiv(n, 2) + 127) // 128) * 128
        tn = min(tn, cap)
    n_blocks = pl.cdiv(n, tn)
    n_pad = n_blocks * tn

    # Single stacked (3, N) input slab -> one lane-dense DMA per grid step.
    xyt = jnp.concatenate(
        [x.reshape(1, n), y.reshape(1, n), t.reshape(1, n)], axis=0)
    if n_pad != n:
        xyt = jnp.pad(xyt, ((0, 0), (0, n_pad - n)))

    # Feature-major weights: h = W^T @ x layout.
    w1t = w1.T                                   # (50, 3)  f32
    b1t = b1.reshape(-1, 1)                      # (50, 1)  f32
    w2t_bf16 = w2.T.astype(jnp.bfloat16)         # (50, 50) bf16 (MXU-native)
    b2t = b2.reshape(-1, 1)                      # (50, 1)  f32
    w3r = w3.reshape(-1, 1)                      # (50, 1)  f32
    b3r = b3.reshape(1, 1)                       # (1, 1)   -> SMEM scalar

    full = lambda arr: pl.BlockSpec(arr.shape, lambda i: (0, 0))

    n_param_bytes = 4 * (3 * 50 + 50 + 50 + 50 + 1) + 2 * 50 * 50
    cost = pl.CostEstimate(
        flops=5450 * n_pad,                 # ~300 + 5000 + 150 per point
        transcendentals=100 * n_pad,        # 2 x 50 tanh per point
        bytes_accessed=16 * n_pad + n_param_bytes,
    )

    out = pl.pallas_call(
        _mlp_kernel,
        out_shape=jax.ShapeDtypeStruct((1, n_pad), jnp.float32),
        grid_spec=pltpu.PrefetchScalarGridSpec(
            num_scalar_prefetch=0,
            grid=(n_blocks,),
            in_specs=[
                pl.BlockSpec((3, tn), lambda i: (0, i)),   # stacked x/y/t tile
                full(w1t), full(b1t),
                full(w2t_bf16), full(b2t),
                full(w3r),
                pl.BlockSpec(memory_space=pltpu.MemorySpace.SMEM),  # b3 scalar
            ],
            out_specs=pl.BlockSpec((1, tn), lambda i: (0, i)),
        ),
        compiler_params=pltpu.CompilerParams(
            dimension_semantics=("parallel",),   # shard steps across v7x's 2 TCs
            vmem_limit_bytes=32 << 20,           # v5e default is only 16 MiB
        ),
        cost_estimate=cost,
    )(xyt, w1t, b1t, w2t_bf16, b2t, w3r, b3r)

    return out[:, :n].reshape(n, 1)


def init_params(key):
    """Deterministic init matching nn.Linear shapes (Kaiming-uniform-ish)."""
    ks = jax.random.split(key, 6)

    def linear(kw, kb, fan_in, fan_out):
        bound = 1.0 / jnp.sqrt(float(fan_in))
        w = jax.random.uniform(kw, (fan_in, fan_out), jnp.float32, -bound, bound)
        b = jax.random.uniform(kb, (fan_out,), jnp.float32, -bound, bound)
        return w, b

    w1, b1 = linear(ks[0], ks[1], 3, 50)
    w2, b2 = linear(ks[2], ks[3], 50, 50)
    w3, b3 = linear(ks[4], ks[5], 50, 1)
    return (w1, b1, w2, b2, w3, b3)


def reference_forward_f32(x, y, t, params):
    """Full-f32, HIGHEST-precision reference (loose check vs bf16 matmul kernel)."""
    w1, b1, w2, b2, w3, b3 = params
    hp = jax.lax.Precision.HIGHEST
    h = jnp.concatenate([x, y, t], axis=1)
    h = jnp.tanh(jnp.dot(h, w1, precision=hp) + b1)
    h = jnp.tanh(jnp.dot(h, w2, precision=hp) + b2)
    return jnp.dot(h, w3, precision=hp) + b3


def reference_forward_mixed(x, y, t, params):
    """Precision-matched reference: f32 layers 1/3, bf16-operand f32-accum layer 2."""
    w1, b1, w2, b2, w3, b3 = params
    xr, yr, tr = x.reshape(1, -1), y.reshape(1, -1), t.reshape(1, -1)
    w1t = w1.T
    z1 = (w1t[:, 0:1] * xr + w1t[:, 1:2] * yr + w1t[:, 2:3] * tr
          + b1.reshape(-1, 1))
    h1 = jnp.tanh(z1)                                            # (50, N)
    z2 = jnp.dot(w2.T.astype(jnp.bfloat16), h1.astype(jnp.bfloat16),
                 preferred_element_type=jnp.float32)
    h2 = jnp.tanh(z2 + b2.reshape(-1, 1))
    out = jnp.sum(h2 * w3.reshape(-1, 1), axis=0, keepdims=True) + b3.reshape(1, 1)
    return out.T                                                 # (N, 1)


if __name__ == "__main__":
    key = jax.random.PRNGKey(0)
    kp, kx, ky, kt = jax.random.split(key, 4)

    params = init_params(kp)

    N = 2048  # with default tile_n the wrapper caps the tile -> 2 grid steps
    x = jax.random.uniform(kx, (N, 1), jnp.float32)
    y = jax.random.uniform(ky, (N, 1), jnp.float32)
    t = jax.random.uniform(kt, (N, 1), jnp.float32)

    out = pinn_2dwave_forward(x, y, t, params)
    out = jax.block_until_ready(out)
    assert out.shape == (N, 1) and out.dtype == jnp.float32

    # Tight check vs a precision-matched (bf16 layer-2) reference.
    ref_mixed = reference_forward_mixed(x, y, t, params)
    assert jnp.allclose(out, ref_mixed, atol=2e-3, rtol=2e-3), \
        "mismatch vs precision-matched reference"

    # Loose sanity check vs the full-f32 reference (bf16 matmul -> ~1e-3 level error).
    ref_f32 = reference_forward_f32(x, y, t, params)
    assert jnp.allclose(out, ref_f32, atol=3e-2, rtol=3e-2), \
        "mismatch vs f32 reference beyond bf16-expected error"

    print("KERNEL_OK")
</pallas_src>

<mosaic_0001>
module attributes {stable_mosaic.version = 11 : i64} {
  func.func @_mlp_kernel(%arg0: i32, %arg1: memref<3x1024xf32, #tpu.memory_space<vmem>>, %arg2: memref<50x3xf32, #tpu.memory_space<vmem>>, %arg3: memref<50x1xf32, #tpu.memory_space<vmem>>, %arg4: memref<50x50xbf16, #tpu.memory_space<vmem>>, %arg5: memref<50x1xf32, #tpu.memory_space<vmem>>, %arg6: memref<50x1xf32, #tpu.memory_space<vmem>>, %arg7: memref<1x1xf32, #tpu.memory_space<smem>>, %arg8: memref<1x1024xf32, #tpu.memory_space<vmem>>) attributes {dimension_semantics = [#tpu.dimension_semantics<parallel>], iteration_bounds = array<i64: 2>, scalar_prefetch = 0 : i64, scratch_operands = 0 : i64, tpu.core_type = #tpu.core_type<tc>, window_params = [{transform_indices = @transform_0, window_bounds = array<i64: 3, 1024>}, {pipeline_mode = #tpu.pipeline_mode<synchronous>, transform_indices = @transform_1, window_bounds = array<i64: 50, 3>}, {pipeline_mode = #tpu.pipeline_mode<synchronous>, transform_indices = @transform_2, window_bounds = array<i64: 50, 1>}, {pipeline_mode = #tpu.pipeline_mode<synchronous>, transform_indices = @transform_3, window_bounds = array<i64: 50, 50>}, {pipeline_mode = #tpu.pipeline_mode<synchronous>, transform_indices = @transform_4, window_bounds = array<i64: 50, 1>}, {pipeline_mode = #tpu.pipeline_mode<synchronous>, transform_indices = @transform_5, window_bounds = array<i64: 50, 1>}, {transform_indices = @transform_6, window_bounds = array<i64: 1, 1>}, {transform_indices = @transform_7, window_bounds = array<i64: 1, 1024>}]} {
    %c0 = arith.constant 0 : index
    %c0_0 = arith.constant 0 : index
    %0 = vector.load %arg1[%c0, %c0_0] : memref<3x1024xf32, #tpu.memory_space<vmem>>, vector<3x1024xf32>
    %c0_1 = arith.constant 0 : index
    %c0_2 = arith.constant 0 : index
    %1 = vector.load %arg2[%c0_1, %c0_2] : memref<50x3xf32, #tpu.memory_space<vmem>>, vector<50x3xf32>
    %2 = vector.extract_strided_slice %1 {offsets = [0, 0], sizes = [50, 1], strides = [1, 1]} : vector<50x3xf32> to vector<50x1xf32>
    %3 = vector.extract_strided_slice %0 {offsets = [0, 0], sizes = [1, 1024], strides = [1, 1]} : vector<3x1024xf32> to vector<1x1024xf32>
    %4 = vector.broadcast %2 : vector<50x1xf32> to vector<50x1024xf32>
    %5 = vector.broadcast %3 : vector<1x1024xf32> to vector<50x1024xf32>
    %6 = arith.mulf %4, %5 : vector<50x1024xf32>
    %7 = vector.extract_strided_slice %1 {offsets = [0, 1], sizes = [50, 1], strides = [1, 1]} : vector<50x3xf32> to vector<50x1xf32>
    %8 = vector.extract_strided_slice %0 {offsets = [1, 0], sizes = [1, 1024], strides = [1, 1]} : vector<3x1024xf32> to vector<1x1024xf32>
    %9 = vector.broadcast %7 : vector<50x1xf32> to vector<50x1024xf32>
    %10 = vector.broadcast %8 : vector<1x1024xf32> to vector<50x1024xf32>
    %11 = arith.mulf %9, %10 : vector<50x1024xf32>
    %12 = arith.addf %6, %11 : vector<50x1024xf32>
    %13 = vector.extract_strided_slice %1 {offsets = [0, 2], sizes = [50, 1], strides = [1, 1]} : vector<50x3xf32> to vector<50x1xf32>
    %14 = vector.extract_strided_slice %0 {offsets = [2, 0], sizes = [1, 1024], strides = [1, 1]} : vector<3x1024xf32> to vector<1x1024xf32>
    %15 = vector.broadcast %13 : vector<50x1xf32> to vector<50x1024xf32>
    %16 = vector.broadcast %14 : vector<1x1024xf32> to vector<50x1024xf32>
    %17 = arith.mulf %15, %16 : vector<50x1024xf32>
    %18 = arith.addf %12, %17 : vector<50x1024xf32>
    %c0_3 = arith.constant 0 : index
    %c0_4 = arith.constant 0 : index
    %19 = vector.load %arg3[%c0_3, %c0_4] : memref<50x1xf32, #tpu.memory_space<vmem>>, vector<50x1xf32>
    %20 = vector.broadcast %19 : vector<50x1xf32> to vector<50x1024xf32>
    %21 = arith.addf %18, %20 : vector<50x1024xf32>
    %22 = math.tanh %21 : vector<50x1024xf32>
    %c0_5 = arith.constant 0 : index
    %c0_6 = arith.constant 0 : index
    %23 = vector.load %arg4[%c0_5, %c0_6] : memref<50x50xbf16, #tpu.memory_space<vmem>>, vector<50x50xbf16>
    %24 = arith.truncf %22 : vector<50x1024xf32> to vector<50x1024xbf16>
    %cst = arith.constant dense<0.000000e+00> : vector<50x1024xf32>
    %25 = tpu.matmul %23, %24, %cst {dimension_numbers = #tpu.dot_dimension_numbers<[1], [0], [0], [1], [0, 0, 1, 1], [], []>} : vector<50x50xbf16>, vector<50x1024xbf16>, vector<50x1024xf32> -> vector<50x1024xf32>
    %c0_7 = arith.constant 0 : index
    %c0_8 = arith.constant 0 : index
    %26 = vector.load %arg5[%c0_7, %c0_8] : memref<50x1xf32, #tpu.memory_space<vmem>>, vector<50x1xf32>
    %27 = vector.broadcast %26 : vector<50x1xf32> to vector<50x1024xf32>
    %28 = arith.addf %25, %27 : vector<50x1024xf32>
    %29 = math.tanh %28 : vector<50x1024xf32>
    %c0_9 = arith.constant 0 : index
    %c0_10 = arith.constant 0 : index
    %30 = vector.load %arg6[%c0_9, %c0_10] : memref<50x1xf32, #tpu.memory_space<vmem>>, vector<50x1xf32>
    %31 = vector.broadcast %30 : vector<50x1xf32> to vector<50x1024xf32>
    %32 = arith.mulf %29, %31 : vector<50x1024xf32>
    %cst_11 = arith.constant dense<0.000000e+00> : vector<1024xf32>
    %33 = vector.multi_reduction <add>, %32, %cst_11 [0] : vector<50x1024xf32> to vector<1024xf32>
    %34 = vector.shape_cast %33 : vector<1024xf32> to vector<1x1024xf32>
    %c0_12 = arith.constant 0 : index
    %c0_13 = arith.constant 0 : index
    %35 = memref.load %arg7[%c0_12, %c0_13] : memref<1x1xf32, #tpu.memory_space<smem>>
    %36 = vector.broadcast %35 : f32 to vector<1x1024xf32>
    %37 = arith.addf %34, %36 : vector<1x1024xf32>
    %c0_14 = arith.constant 0 : index
    %c0_15 = arith.constant 0 : index
    %38 = vector.load %arg8[%c0_14, %c0_15] : memref<1x1024xf32, #tpu.memory_space<vmem>>, vector<1x1024xf32>
    tpu.vector_store %arg8[%c0_14, %c0_15], %37 {strides = array<i32>} : memref<1x1024xf32, #tpu.memory_space<vmem>>, vector<1x1024xf32>,
    return
  }
  func.func @transform_0(%arg0: i32) -> (i32, i32) {
    %c0_i32 = arith.constant 0 : i32
    %c0_i32_0 = arith.constant 0 : i32
    return %c0_i32, %arg0 : i32, i32
  }
  func.func @transform_1(%arg0: i32) -> (i32, i32) {
    %c0_i32 = arith.constant 0 : i32
    %c0_i32_0 = arith.constant 0 : i32
    %c0_i32_1 = arith.constant 0 : i32
    return %c0_i32, %c0_i32_0 : i32, i32
  }
  func.func @transform_2(%arg0: i32) -> (i32, i32) {
    %c0_i32 = arith.constant 0 : i32
    %c0_i32_0 = arith.constant 0 : i32
    %c0_i32_1 = arith.constant 0 : i32
    return %c0_i32, %c0_i32_0 : i32, i32
  }
  func.func @transform_3(%arg0: i32) -> (i32, i32) {
    %c0_i32 = arith.constant 0 : i32
    %c0_i32_0 = arith.constant 0 : i32
    %c0_i32_1 = arith.constant 0 : i32
    return %c0_i32, %c0_i32_0 : i32, i32
  }
  func.func @transform_4(%arg0: i32) -> (i32, i32) {
    %c0_i32 = arith.constant 0 : i32
    %c0_i32_0 = arith.constant 0 : i32
    %c0_i32_1 = arith.constant 0 : i32
    return %c0_i32, %c0_i32_0 : i32, i32
  }
  func.func @transform_5(%arg0: i32) -> (i32, i32) {
    %c0_i32 = arith.constant 0 : i32
    %c0_i32_0 = arith.constant 0 : i32
    %c0_i32_1 = arith.constant 0 : i32
    return %c0_i32, %c0_i32_0 : i32, i32
  }
  func.func @transform_6(%arg0: i32) -> (i32, i32) {
    %c0_i32 = arith.constant 0 : i32
    %c0_i32_0 = arith.constant 0 : i32
    %c0_i32_1 = arith.constant 0 : i32
    return %c0_i32, %c0_i32_0 : i32, i32
  }
  func.func @transform_7(%arg0: i32) -> (i32, i32) {
    %c0_i32 = arith.constant 0 : i32
    %c0_i32_0 = arith.constant 0 : i32
    return %c0_i32, %arg0 : i32, i32
  }
}

</mosaic_0001>

<llo_original>
// kernel: pinn_2dwave_forward.1
$region0: #{pinn_2dwave_forward.1}
  #allocation0 [shape = 'u32[]', space=smem, size = 0x4, offset = 0x4, fixed_abs, tag = 'smem constant byte address 0x4 - core index']
  #allocation1 [shape = 'u32[144,128]{1,0:T(1,128)}', space=vmem, size = 0x12000, scoped, tag = 'internal scratch']
  #allocation2 [shape = 'f32[1,1]{1,0:T(1,128)S(6)}', space=smem, size = 0x200, scoped, tag = 'scoped memory for pinn_2dwave_forward.1']
  %s0 = inlined_call_operand.vmem [shape: f32[3,2048], index: 0, kind: input, shape index: {}]
  %s1 = inlined_call_operand.vmem [shape: f32[50,3], index: 1, kind: input, shape index: {}]
  %s2 = inlined_call_operand.vmem [shape: f32[50,1], index: 2, kind: input, shape index: {}]
  %s3 = inlined_call_operand.vmem [shape: bf16[50,50], index: 3, kind: input, shape index: {}]
  %s4 = inlined_call_operand.vmem [shape: f32[50,1], index: 4, kind: input, shape index: {}]
  %s5 = inlined_call_operand.vmem [shape: f32[50,1], index: 5, kind: input, shape index: {}]
  %s6 = inlined_call_operand.<no memory space> [shape: f32[1,1], index: 6, kind: input, shape index: {}]
  %s7 = inlined_call_operand.hbm [shape: f32[1,2048], index: 7, kind: output, shape index: {}]
  %s8 = sld [smem:[#allocation0]]
  $region61: #{pinn_2dwave_forward.1} parent=0
    _
  %s10 = ssub.s32 1, %s8
  %s11 = scalar_select 0, %s10, %s8
  %12 = sst [smem:[#allocation2]] %s6
  $region1: #{pinn_2dwave_forward.1} parent=0
    #allocation3 [shape = 'u8[8192]{0}', space=vmem, size = 0x2000, scoped, tag = 'output window, operand 0']
    #allocation4 [shape = 's32[2]{0}', space=sflag, size = 0x8, scoped, tag = 'scoped memory for pinn_2dwave_forward.1']
    %13 = vsyncpa [#allocation4], 0
    %s14 = scalar_lea.sflag [#allocation4], 1
    %15 = vsyncpa %s14, 0
    loop: start=0, step=1, limit=4
    $region2: #{pinn_2dwave_forward.1} parent=1 // loop_pre_header
      _
    $region3: #{pinn_2dwave_forward.1} parent=1 // loop_header
      %s17 = sphi 0, %s21
      %p18 = scmp.ge.s32.totalorder %s17, 4
      %s27 = sphi 0, %s29
      %s30 = sphi 0, %s27
      %s31 = sphi 0, %s30
      %s47 = sphi 0, %s31
      %s51 = sphi 0, %s51
      %s53 = sphi 0, %s51
      %s54 = sphi 0, %s53
      %s68 = sphi 0, %s54
      %s72 = sphi 0, %s72
      %s74 = sphi 0, %s72
      %s75 = sphi 0, %s74
      %s89 = sphi 0, %s75
      %s93 = sphi 0, %s93
      %s95 = sphi 0, %s93
      %s96 = sphi 0, %s95
      %s110 = sphi 0, %s96
      %s114 = sphi 0, %s114
      %s116 = sphi 0, %s114
      %s117 = sphi 0, %s116
      %s131 = sphi 0, %s117
      %s135 = sphi 0, %s135
      %s137 = sphi 0, %s135
      %s138 = sphi 0, %s137
      %s152 = sphi 0, %s138
      %s156 = sphi 0, %s156
      %s158 = sphi 0, %s156
      %s159 = sphi 0, %s158
      %s173 = sphi 0, %s159
      %s179 = sphi 0, %s181
      %s182 = sphi 0, %s179
      %s183 = sphi 0, %s182
      %s199 = sphi 0, %s183
    $region4: #{pinn_2dwave_forward.1} parent=1 // loop_header_branch
      %20 = sbr.rel (%p18) target = $region8
    $region5: #{pinn_2dwave_forward.1} parent=1 // loop_body
      %s22 = ssub.s32 %s17, 1
      %s23 = ssub.s32 %s17, 2
      %s24 = sadd.s32 %s17, 1
      %s25 = ssub.s32 %s17, %s24
      %p26 = scmp.eq.s32.totalorder %s25, 0
      %s28 = sadd.s32 %s27, 1
      %s29 = scalar_select %p26, %s27, %s28
      %p32 = pneg %p26
      %p33 = scmp.eq.s32.totalorder %s17, 1
      %p34 = por %p32, %p33
      %p35 = scmp.ne.s32.totalorder %s27, %s30
      %p36 = scmp.eq.s32.totalorder %s17, 0
      %p37 = por %p35, %p36
      %p38 = scmp.ne.s32.totalorder %s27, %s30
      %p39 = scmp.eq.s32.totalorder %s22, 1
      %p40 = por %p38, %p39
      %p41 = scmp.ne.s32.totalorder %s30, %s31
      %p42 = scmp.eq.s32.totalorder %s22, 0
      %p43 = por %p41, %p42
      %p44 = scmp.ne.s32.totalorder %s30, %s31
      %p45 = scmp.eq.s32.totalorder %s23, 1
      %p46 = por %p44, %p45
      %p48 = scmp.ne.s32.totalorder %s31, %s47
      %p49 = scmp.eq.s32.totalorder %s23, 0
      %p50 = por %p48, %p49
      %s52 = sadd.s32 %s51, 1
      %p55 = scmp.eq.s32.totalorder %s17, 1
      %p56 = scmp.ne.s32.totalorder %s51, %s53
      %p57 = scmp.eq.s32.totalorder %s17, 0
      %p58 = por %p56, %p57
      %p59 = scmp.ne.s32.totalorder %s51, %s53
      %p60 = scmp.eq.s32.totalorder %s22, 1
      %p61 = por %p59, %p60
      %p62 = scmp.ne.s32.totalorder %s53, %s54
      %p63 = scmp.eq.s32.totalorder %s22, 0
      %p64 = por %p62, %p63
      %p65 = scmp.ne.s32.totalorder %s53, %s54
      %p66 = scmp.eq.s32.totalorder %s23, 1
      %p67 = por %p65, %p66
      %p69 = scmp.ne.s32.totalorder %s54, %s68
      %p70 = scmp.eq.s32.totalorder %s23, 0
      %p71 = por %p69, %p70
      %s73 = sadd.s32 %s72, 1
      %p76 = scmp.eq.s32.totalorder %s17, 1
      %p77 = scmp.ne.s32.totalorder %s72, %s74
      %p78 = scmp.eq.s32.totalorder %s17, 0
      %p79 = por %p77, %p78
      %p80 = scmp.ne.s32.totalorder %s72, %s74
      %p81 = scmp.eq.s32.totalorder %s22, 1
      %p82 = por %p80, %p81
      %p83 = scmp.ne.s32.totalorder %s74, %s75
      %p84 = scmp.eq.s32.totalorder %s22, 0
      %p85 = por %p83, %p84
      %p86 = scmp.ne.s32.totalorder %s74, %s75
      %p87 = scmp.eq.s32.totalorder %s23, 1
      %p88 = por %p86, %p87
      %p90 = scmp.ne.s32.totalorder %s75, %s89
      %p91 = scmp.eq.s32.totalorder %s23, 0
      %p92 = por %p90, %p91
      %s94 = sadd.s32 %s93, 1
      %p97 = scmp.eq.s32.totalorder %s17, 1
      %p98 = scmp.ne.s32.totalorder %s93, %s95
      %p99 = scmp.eq.s32.totalorder %s17, 0
      %p100 = por %p98, %p99
      %p101 = scmp.ne.s32.totalorder %s93, %s95
      %p102 = scmp.eq.s32.totalorder %s22, 1
      %p103 = por %p101, %p102
      %p104 = scmp.ne.s32.totalorder %s95, %s96
      %p105 = scmp.eq.s32.totalorder %s22, 0
      %p106 = por %p104, %p105
      %p107 = scmp.ne.s32.totalorder %s95, %s96
      %p108 = scmp.eq.s32.totalorder %s23, 1
      %p109 = por %p107, %p108
      %p111 = scmp.ne.s32.totalorder %s96, %s110
      %p112 = scmp.eq.s32.totalorder %s23, 0
      %p113 = por %p111, %p112
      %s115 = sadd.s32 %s114, 1
      %p118 = scmp.eq.s32.totalorder %s17, 1
      %p119 = scmp.ne.s32.totalorder %s114, %s116
      %p120 = scmp.eq.s32.totalorder %s17, 0
      %p121 = por %p119, %p120
      %p122 = scmp.ne.s32.totalorder %s114, %s116
      %p123 = scmp.eq.s32.totalorder %s22, 1
      %p124 = por %p122, %p123
      %p125 = scmp.ne.s32.totalorder %s116, %s117
      %p126 = scmp.eq.s32.totalorder %s22, 0
      %p127 = por %p125, %p126
      %p128 = scmp.ne.s32.totalorder %s116, %s117
      %p129 = scmp.eq.s32.totalorder %s23, 1
      %p130 = por %p128, %p129
      %p132 = scmp.ne.s32.totalorder %s117, %s131
      %p133 = scmp.eq.s32.totalorder %s23, 0
      %p134 = por %p132, %p133
      %s136 = sadd.s32 %s135, 1
      %p139 = scmp.eq.s32.totalorder %s17, 1
      %p140 = scmp.ne.s32.totalorder %s135, %s137
      %p141 = scmp.eq.s32.totalorder %s17, 0
      %p142 = por %p140, %p141
      %p143 = scmp.ne.s32.totalorder %s135, %s137
      %p144 = scmp.eq.s32.totalorder %s22, 1
      %p145 = por %p143, %p144
      %p146 = scmp.ne.s32.totalorder %s137, %s138
      %p147 = scmp.eq.s32.totalorder %s22, 0
      %p148 = por %p146, %p147
      %p149 = scmp.ne.s32.totalorder %s137, %s138
      %p150 = scmp.eq.s32.totalorder %s23, 1
      %p151 = por %p149, %p150
      %p153 = scmp.ne.s32.totalorder %s138, %s152
      %p154 = scmp.eq.s32.totalorder %s23, 0
      %p155 = por %p153, %p154
      %s157 = sadd.s32 %s156, 1
      %p160 = scmp.eq.s32.totalorder %s17, 1
      %p161 = scmp.ne.s32.totalorder %s156, %s158
      %p162 = scmp.eq.s32.totalorder %s17, 0
      %p163 = por %p161, %p162
      %p164 = scmp.ne.s32.totalorder %s156, %s158
      %p165 = scmp.eq.s32.totalorder %s22, 1
      %p166 = por %p164, %p165
      %p167 = scmp.ne.s32.totalorder %s158, %s159
      %p168 = scmp.eq.s32.totalorder %s22, 0
      %p169 = por %p167, %p168
      %p170 = scmp.ne.s32.totalorder %s158, %s159
      %p171 = scmp.eq.s32.totalorder %s23, 1
      %p172 = por %p170, %p171
      %p174 = scmp.ne.s32.totalorder %s159, %s173
      %p175 = scmp.eq.s32.totalorder %s23, 0
      %p176 = por %p174, %p175
      %s177 = ssub.s32 %s17, %s24
      %p178 = scmp.eq.s32.totalorder %s177, 0
      %s180 = sadd.s32 %s179, 1
      %s181 = scalar_select %p178, %s179, %s180
      %p184 = pneg %p178
      %p185 = scmp.eq.s32.totalorder %s17, 1
      %p186 = por %p184, %p185
      %p187 = scmp.ne.s32.totalorder %s179, %s182
      %p188 = scmp.eq.s32.totalorder %s17, 0
      %p189 = por %p187, %p188
      %p190 = scmp.ne.s32.totalorder %s179, %s182
      %p191 = scmp.eq.s32.totalorder %s22, 1
      %p192 = por %p190, %p191
      %p193 = scmp.ne.s32.totalorder %s182, %s183
      %p194 = scmp.eq.s32.totalorder %s22, 0
      %p195 = por %p193, %p194
      %p196 = scmp.ne.s32.totalorder %s182, %s183
      %p197 = scmp.eq.s32.totalorder %s23, 1
      %p198 = por %p196, %p197
      %p200 = scmp.ne.s32.totalorder %s183, %s199
      %p201 = scmp.eq.s32.totalorder %s23, 0
      %p202 = por %p200, %p201
      %p203 = scmp.le.s32.totalorder 1, %s17
      %p204 = scmp.lt.s32.totalorder %s17, 3
      %p205 = pnand %p203, %p204
      %p206 = pneg %p205
      // Predicated region
      $region9: #{pinn_2dwave_forward.1} parent=5 // pred_check
        _
      $region10: #{pinn_2dwave_forward.1} parent=5 // pred_check_branch
        %208 = sbr.rel (%p205) target = $region12
      $region11: #{pinn_2dwave_forward.1} parent=5 // pred_region
        %s209 = ssub.s32 %s17, 1
        // Predicated region
        $region13: #{pinn_2dwave_forward.1} parent=11 // pred_check
          %p210 = pneg %p64
        $region14: #{pinn_2dwave_forward.1} parent=11 // pred_check_branch
          %212 = sbr.rel (%p210) target = $region16
        $region15: #{pinn_2dwave_forward.1} parent=11 // pred_region
          _
        $region16: #{pinn_2dwave_forward.1} parent=11 // pred_fallthru
          _
        // Predicated region
        $region17: #{pinn_2dwave_forward.1} parent=11 // pred_check
          %p213 = pneg %p85
        $region18: #{pinn_2dwave_forward.1} parent=11 // pred_check_branch
          %215 = sbr.rel (%p213) target = $region20
        $region19: #{pinn_2dwave_forward.1} parent=11 // pred_region
          _
        $region20: #{pinn_2dwave_forward.1} parent=11 // pred_fallthru
          _
        // Predicated region
        $region21: #{pinn_2dwave_forward.1} parent=11 // pred_check
          %p216 = pneg %p106
        $region22: #{pinn_2dwave_forward.1} parent=11 // pred_check_branch
          %218 = sbr.rel (%p216) target = $region24
        $region23: #{pinn_2dwave_forward.1} parent=11 // pred_region
          _
        $region24: #{pinn_2dwave_forward.1} parent=11 // pred_fallthru
          _
        // Predicated region
        $region25: #{pinn_2dwave_forward.1} parent=11 // pred_check
          %p219 = pneg %p127
        $region26: #{pinn_2dwave_forward.1} parent=11 // pred_check_branch
          %221 = sbr.rel (%p219) target = $region28
        $region27: #{pinn_2dwave_forward.1} parent=11 // pred_region
          _
        $region28: #{pinn_2dwave_forward.1} parent=11 // pred_fallthru
          _
        // Predicated region
        $region29: #{pinn_2dwave_forward.1} parent=11 // pred_check
          %p222 = pneg %p148
        $region30: #{pinn_2dwave_forward.1} parent=11 // pred_check_branch
          %224 = sbr.rel (%p222) target = $region32
        $region31: #{pinn_2dwave_forward.1} parent=11 // pred_region
          _
        $region32: #{pinn_2dwave_forward.1} parent=11 // pred_fallthru
          _
        // Predicated region
        $region33: #{pinn_2dwave_forward.1} parent=11 // pred_check
          %p225 = pneg %p169
        $region34: #{pinn_2dwave_forward.1} parent=11 // pred_check_branch
          %227 = sbr.rel (%p225) target = $region36
        $region35: #{pinn_2dwave_forward.1} parent=11 // pred_region
          _
        $region36: #{pinn_2dwave_forward.1} parent=11 // pred_fallthru
          _
      $region12: #{pinn_2dwave_forward.1} parent=5 // pred_fallthru
        _
      %p228 = scmp.lt.s32.totalorder %s17, 2
      // Predicated region
      $region37: #{pinn_2dwave_forward.1} parent=5 // pred_check
        %p229 = pneg %p228
      $region38: #{pinn_2dwave_forward.1} parent=5 // pred_check_branch
        %231 = sbr.rel (%p229) target = $region40
      $region39: #{pinn_2dwave_forward.1} parent=5 // pred_region
        // Predicated region
        $region41: #{pinn_2dwave_forward.1} parent=39 // pred_check
          %p232 = pneg %p37
        $region42: #{pinn_2dwave_forward.1} parent=39 // pred_check_branch
          %234 = sbr.rel (%p232) target = $region44
        $region43: #{pinn_2dwave_forward.1} parent=39 // pred_region
          %s235 = smul.u32 8, %s17
          %p236 = scmp.lt.s32.totalorder %s235, 15
          %s237 = scalar_select %p236, %s235, 15
          %s238 = smul.addr %s237, 4
          %s239 = scalar_lea.vmem %s0, %s238
          %s240 = smul.u32 8, %s17
        $region44: #{pinn_2dwave_forward.1} parent=39 // pred_fallthru
          _
      $region40: #{pinn_2dwave_forward.1} parent=5 // pred_fallthru
        _
      %p241 = scmp.le.s32.totalorder 1, %s17
      %p242 = scmp.lt.s32.totalorder %s17, 3
      %p243 = pnand %p241, %p242
      %p244 = pneg %p243
      // Predicated region
      $region45: #{pinn_2dwave_forward.1} parent=5 // pred_check
        _
      $region46: #{pinn_2dwave_forward.1} parent=5 // pred_check_branch
        %246 = sbr.rel (%p243) target = $region48
      $region47: #{pinn_2dwave_forward.1} parent=5 // pred_region
        %s247 = ssub.s32 %s17, 1
        %s248 = smul.u32 8, %s22
        %p249 = scmp.lt.s32.totalorder %s248, 15
        %s250 = scalar_select %p249, %s248, 15
        %s251 = smul.addr %s250, 4
        %s252 = scalar_lea.vmem %s0, %s251
        %p253 = pneg %p43
        %p254 = pneg %p40
        %p255 = pneg %p64
        %p256 = pneg %p61
        %p257 = pneg %p85
        %p258 = pneg %p82
        %p259 = pneg %p106
        %p260 = pneg %p103
        %p261 = pneg %p127
        %p262 = pneg %p124
        %p263 = pneg %p148
        %p264 = pneg %p145
        %p265 = pneg %p169
        %p266 = pneg %p166
        %p267 = pneg %p195
        %p268 = pneg %p192
        %s269 = sand.u32 %s182, 1
        %s270 = scalar_lea.sflag [#allocation4], %s269
        %s271 = sand.u32 %s182, 1
        %s272 = smul.addr %s271, 8
        %s273 = scalar_lea.vmem [#allocation3], %s272
        %s274 = smul.u32 8, %s22
        %p275 = scmp.lt.s32.totalorder %s274, 15
        %s276 = scalar_select %p275, %s274, 15
        %s277 = smul.addr %s276, 4
        %s278 = scalar_lea.vmem %s0, %s277
        %s279 = smul.u32 8, %s22
        %s280 = smul.u32 8, %s22
        %v282 = vld [vmem:[%s278] sm:$0x77]
        %v283 = vld [vmem:[%s278 + $0x8] sm:$0x77]
        %v284 = vld [vmem:[%s278 + $0x10] sm:$0x77]
        %v285 = vld [vmem:[%s278 + $0x18] sm:$0x77]
        %v286 = vld [vmem:[%s1] sm:$0xff]
        %v287 = vld [vmem:[%s1 + $0x8] sm:$0xff]
        %v288 = vld [vmem:[%s1 + $0x10] sm:$0xff]
        %v289 = vld [vmem:[%s1 + $0x18] sm:$0xff]
        %v290 = vld [vmem:[%s1 + $0x20] sm:$0xff]
        %v291 = vld [vmem:[%s1 + $0x28] sm:$0xff]
        %v292 = vld [vmem:[%s1 + $0x30] sm:$0x3]
        %294 = vset.pattern.permute.xlu0 0
        %295 = vperm.xlu0 %294, %v286
        %v296 = vpop.permute.xlu0 %295
        %299 = vset.pattern.permute.xlu0 0
        %300 = vperm.xlu0 %299, %v287
        %v301 = vpop.permute.xlu0 %300
        %304 = vset.pattern.permute.xlu0 0
        %305 = vperm.xlu0 %304, %v288
        %v306 = vpop.permute.xlu0 %305
        %309 = vset.pattern.permute.xlu0 0
        %310 = vperm.xlu0 %309, %v289
        %v311 = vpop.permute.xlu0 %310
        %314 = vset.pattern.permute.xlu0 0
        %315 = vperm.xlu0 %314, %v290
        %v316 = vpop.permute.xlu0 %315
        %319 = vset.pattern.permute.xlu0 0
        %320 = vperm.xlu0 %319, %v291
        %v321 = vpop.permute.xlu0 %320
        %324 = vset.pattern.permute.xlu0 0
        %325 = vperm.xlu0 %324, %v292
        %v326 = vpop.permute.xlu0 %325
        %v332 = vlaneseq
        %v333 = vshrl.u32 %v332, 7
        %v334 = vsub.s32 0, %v333
        %v335 = vrot.slane %v282, %v334
        %v336 = vlaneseq
        %v337 = vshrl.u32 %v336, 7
        %v338 = vsub.s32 4, %v337
        %v339 = vrot.slane %v282, %v338
        %v340 = vlaneseq
        %v341 = vshrl.u32 %v340, 7
        %v342 = vsub.s32 0, %v341
        %v343 = vrot.slane %v283, %v342
        %v344 = vlaneseq
        %v345 = vshrl.u32 %v344, 7
        %v346 = vsub.s32 4, %v345
        %v347 = vrot.slane %v283, %v346
        %v348 = vlaneseq
        %v349 = vshrl.u32 %v348, 7
        %v350 = vsub.s32 0, %v349
        %v351 = vrot.slane %v284, %v350
        %v352 = vlaneseq
        %v353 = vshrl.u32 %v352, 7
        %v354 = vsub.s32 4, %v353
        %v355 = vrot.slane %v284, %v354
        %v356 = vlaneseq
        %v357 = vshrl.u32 %v356, 7
        %v358 = vsub.s32 0, %v357
        %v359 = vrot.slane %v285, %v358
        %v360 = vlaneseq
        %v361 = vshrl.u32 %v360, 7
        %v362 = vsub.s32 4, %v361
        %v363 = vrot.slane %v285, %v362
        %v372 = vlaneseq
        %v373 = vshrl.u32 %v372, 7
        %v374 = vsub.s32 0, %v373
        %v375 = vrot.slane %v335, %v374
        %v376 = vlaneseq
        %v377 = vshrl.u32 %v376, 7
        %v378 = vsub.s32 0, %v377
        %v379 = vrot.slane %v339, %v378
        %v380 = vlaneseq
        %v381 = vshrl.u32 %v380, 7
        %v382 = vsub.s32 0, %v381
        %v383 = vrot.slane %v343, %v382
        %v384 = vlaneseq
        %v385 = vshrl.u32 %v384, 7
        %v386 = vsub.s32 0, %v385
        %v387 = vrot.slane %v347, %v386
        %v388 = vlaneseq
        %v389 = vshrl.u32 %v388, 7
        %v390 = vsub.s32 0, %v389
        %v391 = vrot.slane %v351, %v390
        %v392 = vlaneseq
        %v393 = vshrl.u32 %v392, 7
        %v394 = vsub.s32 0, %v393
        %v395 = vrot.slane %v355, %v394
        %v396 = vlaneseq
        %v397 = vshrl.u32 %v396, 7
        %v398 = vsub.s32 0, %v397
        %v399 = vrot.slane %v359, %v398
        %v400 = vlaneseq
        %v401 = vshrl.u32 %v400, 7
        %v402 = vsub.s32 0, %v401
        %v403 = vrot.slane %v363, %v402
        %v404 = vmul.f32 %v296, %v375
        %v405 = vmul.f32 %v296, %v379
        %v406 = vmul.f32 %v296, %v383
        %v407 = vmul.f32 %v296, %v387
        %v408 = vmul.f32 %v296, %v391
        %v409 = vmul.f32 %v296, %v395
        %v410 = vmul.f32 %v296, %v399
        %v411 = vmul.f32 %v296, %v403
        %v412 = vmul.f32 %v301, %v375
        %v413 = vmul.f32 %v301, %v379
        %v414 = vmul.f32 %v301, %v383
        %v415 = vmul.f32 %v301, %v387
        %v416 = vmul.f32 %v301, %v391
        %v417 = vmul.f32 %v301, %v395
        %v418 = vmul.f32 %v301, %v399
        %v419 = vmul.f32 %v301, %v403
        %v420 = vmul.f32 %v306, %v375
        %v421 = vmul.f32 %v306, %v379
        %v422 = vmul.f32 %v306, %v383
        %v423 = vmul.f32 %v306, %v387
        %v424 = vmul.f32 %v306, %v391
        %v425 = vmul.f32 %v306, %v395
        %v426 = vmul.f32 %v306, %v399
        %v427 = vmul.f32 %v306, %v403
        %v428 = vmul.f32 %v311, %v375
        %v429 = vmul.f32 %v311, %v379
        %v430 = vmul.f32 %v311, %v383
        %v431 = vmul.f32 %v311, %v387
        %v432 = vmul.f32 %v311, %v391
        %v433 = vmul.f32 %v311, %v395
        %v434 = vmul.f32 %v311, %v399
        %v435 = vmul.f32 %v311, %v403
        %v436 = vmul.f32 %v316, %v375
        %v437 = vmul.f32 %v316, %v379
        %v438 = vmul.f32 %v316, %v383
        %v439 = vmul.f32 %v316, %v387
        %v440 = vmul.f32 %v316, %v391
        %v441 = vmul.f32 %v316, %v395
        %v442 = vmul.f32 %v316, %v399
        %v443 = vmul.f32 %v316, %v403
        %v444 = vmul.f32 %v321, %v375
        %v445 = vmul.f32 %v321, %v379
        %v446 = vmul.f32 %v321, %v383
        %v447 = vmul.f32 %v321, %v387
        %v448 = vmul.f32 %v321, %v391
        %v449 = vmul.f32 %v321, %v395
        %v450 = vmul.f32 %v321, %v399
        %v451 = vmul.f32 %v321, %v403
        %v452 = vmul.f32 %v326, %v375
        %v453 = vmul.f32 %v326, %v379
        %v454 = vmul.f32 %v326, %v383
        %v455 = vmul.f32 %v326, %v387
        %v456 = vmul.f32 %v326, %v391
        %v457 = vmul.f32 %v326, %v395
        %v458 = vmul.f32 %v326, %v399
        %v459 = vmul.f32 %v326, %v403
        %460 = vset.pattern.permute.xlu0 1
        %461 = vperm.xlu0 %460, %v286
        %v462 = vpop.permute.xlu0 %461
        %464 = vset.pattern.permute.xlu0 1
        %465 = vperm.xlu0 %464, %v287
        %v466 = vpop.permute.xlu0 %465
        %468 = vset.pattern.permute.xlu0 1
        %469 = vperm.xlu0 %468, %v288
        %v470 = vpop.permute.xlu0 %469
        %472 = vset.pattern.permute.xlu0 1
        %473 = vperm.xlu0 %472, %v289
        %v474 = vpop.permute.xlu0 %473
        %476 = vset.pattern.permute.xlu0 1
        %477 = vperm.xlu0 %476, %v290
        %v478 = vpop.permute.xlu0 %477
        %480 = vset.pattern.permute.xlu0 1
        %481 = vperm.xlu0 %480, %v291
        %v482 = vpop.permute.xlu0 %481
        %484 = vset.pattern.permute.xlu0 1
        %485 = vperm.xlu0 %484, %v292
        %v486 = vpop.permute.xlu0 %485
        %v488 = vlaneseq
        %v489 = vshrl.u32 %v488, 7
        %v490 = vsub.s32 1, %v489
        %v491 = vrot.slane %v282, %v490
        %v492 = vlaneseq
        %v493 = vshrl.u32 %v492, 7
        %v494 = vsub.s32 5, %v493
        %v495 = vrot.slane %v282, %v494
        %v496 = vlaneseq
        %v497 = vshrl.u32 %v496, 7
        %v498 = vsub.s32 1, %v497
        %v499 = vrot.slane %v283, %v498
        %v500 = vlaneseq
        %v501 = vshrl.u32 %v500, 7
        %v502 = vsub.s32 5, %v501
        %v503 = vrot.slane %v283, %v502
        %v504 = vlaneseq
        %v505 = vshrl.u32 %v504, 7
        %v506 = vsub.s32 1, %v505
        %v507 = vrot.slane %v284, %v506
        %v508 = vlaneseq
        %v509 = vshrl.u32 %v508, 7
        %v510 = vsub.s32 5, %v509
        %v511 = vrot.slane %v284, %v510
        %v512 = vlaneseq
        %v513 = vshrl.u32 %v512, 7
        %v514 = vsub.s32 1, %v513
        %v515 = vrot.slane %v285, %v514
        %v516 = vlaneseq
        %v517 = vshrl.u32 %v516, 7
        %v518 = vsub.s32 5, %v517
        %v519 = vrot.slane %v285, %v518
        %v528 = vlaneseq
        %v529 = vshrl.u32 %v528, 7
        %v530 = vsub.s32 1, %v529
        %v531 = vrot.slane %v491, %v530
        %v532 = vlaneseq
        %v533 = vshrl.u32 %v532, 7
        %v534 = vsub.s32 1, %v533
        %v535 = vrot.slane %v495, %v534
        %v536 = vlaneseq
        %v537 = vshrl.u32 %v536, 7
        %v538 = vsub.s32 1, %v537
        %v539 = vrot.slane %v499, %v538
        %v540 = vlaneseq
        %v541 = vshrl.u32 %v540, 7
        %v542 = vsub.s32 1, %v541
        %v543 = vrot.slane %v503, %v542
        %v544 = vlaneseq
        %v545 = vshrl.u32 %v544, 7
        %v546 = vsub.s32 1, %v545
        %v547 = vrot.slane %v507, %v546
        %v548 = vlaneseq
        %v549 = vshrl.u32 %v548, 7
        %v550 = vsub.s32 1, %v549
        %v551 = vrot.slane %v511, %v550
        %v552 = vlaneseq
        %v553 = vshrl.u32 %v552, 7
        %v554 = vsub.s32 1, %v553
        %v555 = vrot.slane %v515, %v554
        %v556 = vlaneseq
        %v557 = vshrl.u32 %v556, 7
        %v558 = vsub.s32 1, %v557
        %v559 = vrot.slane %v519, %v558
        %v560 = vmul.f32 %v462, %v531
        %v561 = vmul.f32 %v462, %v535
        %v562 = vmul.f32 %v462, %v539
        %v563 = vmul.f32 %v462, %v543
        %v564 = vmul.f32 %v462, %v547
        %v565 = vmul.f32 %v462, %v551
        %v566 = vmul.f32 %v462, %v555
        %v567 = vmul.f32 %v462, %v559
        %v568 = vmul.f32 %v466, %v531
        %v569 = vmul.f32 %v466, %v535
        %v570 = vmul.f32 %v466, %v539
        %v571 = vmul.f32 %v466, %v543
        %v572 = vmul.f32 %v466, %v547
        %v573 = vmul.f32 %v466, %v551
        %v574 = vmul.f32 %v466, %v555
        %v575 = vmul.f32 %v466, %v559
        %v576 = vmul.f32 %v470, %v531
        %v577 = vmul.f32 %v470, %v535
        %v578 = vmul.f32 %v470, %v539
        %v579 = vmul.f32 %v470, %v543
        %v580 = vmul.f32 %v470, %v547
        %v581 = vmul.f32 %v470, %v551
        %v582 = vmul.f32 %v470, %v555
        %v583 = vmul.f32 %v470, %v559
        %v584 = vmul.f32 %v474, %v531
        %v585 = vmul.f32 %v474, %v535
        %v586 = vmul.f32 %v474, %v539
        %v587 = vmul.f32 %v474, %v543
        %v588 = vmul.f32 %v474, %v547
        %v589 = vmul.f32 %v474, %v551
        %v590 = vmul.f32 %v474, %v555
        %v591 = vmul.f32 %v474, %v559
        %v592 = vmul.f32 %v478, %v531
        %v593 = vmul.f32 %v478, %v535
        %v594 = vmul.f32 %v478, %v539
        %v595 = vmul.f32 %v478, %v543
        %v596 = vmul.f32 %v478, %v547
        %v597 = vmul.f32 %v478, %v551
        %v598 = vmul.f32 %v478, %v555
        %v599 = vmul.f32 %v478, %v559
        %v600 = vmul.f32 %v482, %v531
        %v601 = vmul.f32 %v482, %v535
        %v602 = vmul.f32 %v482, %v539
        %v603 = vmul.f32 %v482, %v543
        %v604 = vmul.f32 %v482, %v547
        %v605 = vmul.f32 %v482, %v551
        %v606 = vmul.f32 %v482, %v555
        %v607 = vmul.f32 %v482, %v559
        %v608 = vmul.f32 %v486, %v531
        %v609 = vmul.f32 %v486, %v535
        %v610 = vmul.f32 %v486, %v539
        %v611 = vmul.f32 %v486, %v543
        %v612 = vmul.f32 %v486, %v547
        %v613 = vmul.f32 %v486, %v551
        %v614 = vmul.f32 %v486, %v555
        %v615 = vmul.f32 %v486, %v559
        %v616 = vadd.f32 %v404, %v560
        %v617 = vadd.f32 %v405, %v561
        %v618 = vadd.f32 %v406, %v562
        %v619 = vadd.f32 %v407, %v563
        %v620 = vadd.f32 %v408, %v564
        %v621 = vadd.f32 %v409, %v565
        %v622 = vadd.f32 %v410, %v566
        %v623 = vadd.f32 %v411, %v567
        %v624 = vadd.f32 %v412, %v568
        %v625 = vadd.f32 %v413, %v569
        %v626 = vadd.f32 %v414, %v570
        %v627 = vadd.f32 %v415, %v571
        %v628 = vadd.f32 %v416, %v572
        %v629 = vadd.f32 %v417, %v573
        %v630 = vadd.f32 %v418, %v574
        %v631 = vadd.f32 %v419, %v575
        %v632 = vadd.f32 %v420, %v576
        %v633 = vadd.f32 %v421, %v577
        %v634 = vadd.f32 %v422, %v578
        %v635 = vadd.f32 %v423, %v579
        %v636 = vadd.f32 %v424, %v580
        %v637 = vadd.f32 %v425, %v581
        %v638 = vadd.f32 %v426, %v582
        %v639 = vadd.f32 %v427, %v583
        %v640 = vadd.f32 %v428, %v584
        %v641 = vadd.f32 %v429, %v585
        %v642 = vadd.f32 %v430, %v586
        %v643 = vadd.f32 %v431, %v587
        %v644 = vadd.f32 %v432, %v588
        %v645 = vadd.f32 %v433, %v589
        %v646 = vadd.f32 %v434, %v590
        %v647 = vadd.f32 %v435, %v591
        %v648 = vadd.f32 %v436, %v592
        %v649 = vadd.f32 %v437, %v593
        %v650 = vadd.f32 %v438, %v594
        %v651 = vadd.f32 %v439, %v595
        %v652 = vadd.f32 %v440, %v596
        %v653 = vadd.f32 %v441, %v597
        %v654 = vadd.f32 %v442, %v598
        %v655 = vadd.f32 %v443, %v599
        %v656 = vadd.f32 %v444, %v600
        %v657 = vadd.f32 %v445, %v601
        %v658 = vadd.f32 %v446, %v602
        %v659 = vadd.f32 %v447, %v603
        %v660 = vadd.f32 %v448, %v604
        %v661 = vadd.f32 %v449, %v605
        %v662 = vadd.f32 %v450, %v606
        %v663 = vadd.f32 %v451, %v607
        %v664 = vadd.f32 %v452, %v608
        %v665 = vadd.f32 %v453, %v609
        %v666 = vadd.f32 %v454, %v610
        %v667 = vadd.f32 %v455, %v611
        %v668 = vadd.f32 %v456, %v612
        %v669 = vadd.f32 %v457, %v613
        %v670 = vadd.f32 %v458, %v614
        %v671 = vadd.f32 %v459, %v615
        %672 = vset.pattern.permute.xlu0 2
        %673 = vperm.xlu0 %672, %v286
        %v674 = vpop.permute.xlu0 %673
        %676 = vset.pattern.permute.xlu0 2
        %677 = vperm.xlu0 %676, %v287
        %v678 = vpop.permute.xlu0 %677
        %680 = vset.pattern.permute.xlu0 2
        %681 = vperm.xlu0 %680, %v288
        %v682 = vpop.permute.xlu0 %681
        %684 = vset.pattern.permute.xlu0 2
        %685 = vperm.xlu0 %684, %v289
        %v686 = vpop.permute.xlu0 %685
        %688 = vset.pattern.permute.xlu0 2
        %689 = vperm.xlu0 %688, %v290
        %v690 = vpop.permute.xlu0 %689
        %692 = vset.pattern.permute.xlu0 2
        %693 = vperm.xlu0 %692, %v291
        %v694 = vpop.permute.xlu0 %693
        %696 = vset.pattern.permute.xlu0 2
        %697 = vperm.xlu0 %696, %v292
        %v698 = vpop.permute.xlu0 %697
        %v700 = vlaneseq
        %v701 = vshrl.u32 %v700, 7
        %v702 = vsub.s32 2, %v701
        %v703 = vrot.slane %v282, %v702
        %v704 = vlaneseq
        %v705 = vshrl.u32 %v704, 7
        %v706 = vsub.s32 6, %v705
        %v707 = vrot.slane %v282, %v706
        %v708 = vlaneseq
        %v709 = vshrl.u32 %v708, 7
        %v710 = vsub.s32 2, %v709
        %v711 = vrot.slane %v283, %v710
        %v712 = vlaneseq
        %v713 = vshrl.u32 %v712, 7
        %v714 = vsub.s32 6, %v713
        %v715 = vrot.slane %v283, %v714
        %v716 = vlaneseq
        %v717 = vshrl.u32 %v716, 7
        %v718 = vsub.s32 2, %v717
        %v719 = vrot.slane %v284, %v718
        %v720 = vlaneseq
        %v721 = vshrl.u32 %v720, 7
        %v722 = vsub.s32 6, %v721
        %v723 = vrot.slane %v284, %v722
        %v724 = vlaneseq
        %v725 = vshrl.u32 %v724, 7
        %v726 = vsub.s32 2, %v725
        %v727 = vrot.slane %v285, %v726
        %v728 = vlaneseq
        %v729 = vshrl.u32 %v728, 7
        %v730 = vsub.s32 6, %v729
        %v731 = vrot.slane %v285, %v730
        %v740 = vlaneseq
        %v741 = vshrl.u32 %v740, 7
        %v742 = vsub.s32 2, %v741
        %v743 = vrot.slane %v703, %v742
        %v744 = vlaneseq
        %v745 = vshrl.u32 %v744, 7
        %v746 = vsub.s32 2, %v745
        %v747 = vrot.slane %v707, %v746
        %v748 = vlaneseq
        %v749 = vshrl.u32 %v748, 7
        %v750 = vsub.s32 2, %v749
        %v751 = vrot.slane %v711, %v750
        %v752 = vlaneseq
        %v753 = vshrl.u32 %v752, 7
        %v754 = vsub.s32 2, %v753
        %v755 = vrot.slane %v715, %v754
        %v756 = vlaneseq
        %v757 = vshrl.u32 %v756, 7
        %v758 = vsub.s32 2, %v757
        %v759 = vrot.slane %v719, %v758
        %v760 = vlaneseq
        %v761 = vshrl.u32 %v760, 7
        %v762 = vsub.s32 2, %v761
        %v763 = vrot.slane %v723, %v762
        %v764 = vlaneseq
        %v765 = vshrl.u32 %v764, 7
        %v766 = vsub.s32 2, %v765
        %v767 = vrot.slane %v727, %v766
        %v768 = vlaneseq
        %v769 = vshrl.u32 %v768, 7
        %v770 = vsub.s32 2, %v769
        %v771 = vrot.slane %v731, %v770
        %v772 = vmul.f32 %v674, %v743
        %v773 = vmul.f32 %v674, %v747
        %v774 = vmul.f32 %v674, %v751
        %v775 = vmul.f32 %v674, %v755
        %v776 = vmul.f32 %v674, %v759
        %v777 = vmul.f32 %v674, %v763
        %v778 = vmul.f32 %v674, %v767
        %v779 = vmul.f32 %v674, %v771
        %v780 = vmul.f32 %v678, %v743
        %v781 = vmul.f32 %v678, %v747
        %v782 = vmul.f32 %v678, %v751
        %v783 = vmul.f32 %v678, %v755
        %v784 = vmul.f32 %v678, %v759
        %v785 = vmul.f32 %v678, %v763
        %v786 = vmul.f32 %v678, %v767
        %v787 = vmul.f32 %v678, %v771
        %v788 = vmul.f32 %v682, %v743
        %v789 = vmul.f32 %v682, %v747
        %v790 = vmul.f32 %v682, %v751
        %v791 = vmul.f32 %v682, %v755
        %v792 = vmul.f32 %v682, %v759
        %v793 = vmul.f32 %v682, %v763
        %v794 = vmul.f32 %v682, %v767
        %v795 = vmul.f32 %v682, %v771
        %v796 = vmul.f32 %v686, %v743
        %v797 = vmul.f32 %v686, %v747
        %v798 = vmul.f32 %v686, %v751
        %v799 = vmul.f32 %v686, %v755
        %v800 = vmul.f32 %v686, %v759
        %v801 = vmul.f32 %v686, %v763
        %v802 = vmul.f32 %v686, %v767
        %v803 = vmul.f32 %v686, %v771
        %v804 = vmul.f32 %v690, %v743
        %v805 = vmul.f32 %v690, %v747
        %v806 = vmul.f32 %v690, %v751
        %v807 = vmul.f32 %v690, %v755
        %v808 = vmul.f32 %v690, %v759
        %v809 = vmul.f32 %v690, %v763
        %v810 = vmul.f32 %v690, %v767
        %v811 = vmul.f32 %v690, %v771
        %v812 = vmul.f32 %v694, %v743
        %v813 = vmul.f32 %v694, %v747
        %v814 = vmul.f32 %v694, %v751
        %v815 = vmul.f32 %v694, %v755
        %v816 = vmul.f32 %v694, %v759
        %v817 = vmul.f32 %v694, %v763
        %v818 = vmul.f32 %v694, %v767
        %v819 = vmul.f32 %v694, %v771
        %v820 = vmul.f32 %v698, %v743
        %v821 = vmul.f32 %v698, %v747
        %v822 = vmul.f32 %v698, %v751
        %v823 = vmul.f32 %v698, %v755
        %v824 = vmul.f32 %v698, %v759
        %v825 = vmul.f32 %v698, %v763
        %v826 = vmul.f32 %v698, %v767
        %v827 = vmul.f32 %v698, %v771
        %v828 = vadd.f32 %v616, %v772
        %v829 = vadd.f32 %v617, %v773
        %v830 = vadd.f32 %v618, %v774
        %v831 = vadd.f32 %v619, %v775
        %v832 = vadd.f32 %v620, %v776
        %v833 = vadd.f32 %v621, %v777
        %v834 = vadd.f32 %v622, %v778
        %v835 = vadd.f32 %v623, %v779
        %v836 = vadd.f32 %v624, %v780
        %v837 = vadd.f32 %v625, %v781
        %v838 = vadd.f32 %v626, %v782
        %v839 = vadd.f32 %v627, %v783
        %v840 = vadd.f32 %v628, %v784
        %v841 = vadd.f32 %v629, %v785
        %v842 = vadd.f32 %v630, %v786
        %v843 = vadd.f32 %v631, %v787
        %v844 = vadd.f32 %v632, %v788
        %v845 = vadd.f32 %v633, %v789
        %v846 = vadd.f32 %v634, %v790
        %v847 = vadd.f32 %v635, %v791
        %v848 = vadd.f32 %v636, %v792
        %v849 = vadd.f32 %v637, %v793
        %v850 = vadd.f32 %v638, %v794
        %v851 = vadd.f32 %v639, %v795
        %v852 = vadd.f32 %v640, %v796
        %v853 = vadd.f32 %v641, %v797
        %v854 = vadd.f32 %v642, %v798
        %v855 = vadd.f32 %v643, %v799
        %v856 = vadd.f32 %v644, %v800
        %v857 = vadd.f32 %v645, %v801
        %v858 = vadd.f32 %v646, %v802
        %v859 = vadd.f32 %v647, %v803
        %v860 = vadd.f32 %v648, %v804
        %v861 = vadd.f32 %v649, %v805
        %v862 = vadd.f32 %v650, %v806
        %v863 = vadd.f32 %v651, %v807
        %v864 = vadd.f32 %v652, %v808
        %v865 = vadd.f32 %v653, %v809
        %v866 = vadd.f32 %v654, %v810
        %v867 = vadd.f32 %v655, %v811
        %v868 = vadd.f32 %v656, %v812
        %v869 = vadd.f32 %v657, %v813
        %v870 = vadd.f32 %v658, %v814
        %v871 = vadd.f32 %v659, %v815
        %v872 = vadd.f32 %v660, %v816
        %v873 = vadd.f32 %v661, %v817
        %v874 = vadd.f32 %v662, %v818
        %v875 = vadd.f32 %v663, %v819
        %v876 = vadd.f32 %v664, %v820
        %v877 = vadd.f32 %v665, %v821
        %v878 = vadd.f32 %v666, %v822
        %v879 = vadd.f32 %v667, %v823
        %v880 = vadd.f32 %v668, %v824
        %v881 = vadd.f32 %v669, %v825
        %v882 = vadd.f32 %v670, %v826
        %v883 = vadd.f32 %v671, %v827
        %v884 = vld [vmem:[%s2] sm:$0xff]
        %v885 = vld [vmem:[%s2 + $0x8] sm:$0xff]
        %v886 = vld [vmem:[%s2 + $0x10] sm:$0xff]
        %v887 = vld [vmem:[%s2 + $0x18] sm:$0xff]
        %v888 = vld [vmem:[%s2 + $0x20] sm:$0xff]
        %v889 = vld [vmem:[%s2 + $0x28] sm:$0xff]
        %v890 = vld [vmem:[%s2 + $0x30] sm:$0x3]
        %892 = vset.pattern.permute.xlu0 0
        %893 = vperm.xlu0 %892, %v884
        %v894 = vpop.permute.xlu0 %893
        %897 = vset.pattern.permute.xlu0 0
        %898 = vperm.xlu0 %897, %v885
        %v899 = vpop.permute.xlu0 %898
        %902 = vset.pattern.permute.xlu0 0
        %903 = vperm.xlu0 %902, %v886
        %v904 = vpop.permute.xlu0 %903
        %907 = vset.pattern.permute.xlu0 0
        %908 = vperm.xlu0 %907, %v887
        %v909 = vpop.permute.xlu0 %908
        %912 = vset.pattern.permute.xlu0 0
        %913 = vperm.xlu0 %912, %v888
        %v914 = vpop.permute.xlu0 %913
        %917 = vset.pattern.permute.xlu0 0
        %918 = vperm.xlu0 %917, %v889
        %v919 = vpop.permute.xlu0 %918
        %922 = vset.pattern.permute.xlu0 0
        %923 = vperm.xlu0 %922, %v890
        %v924 = vpop.permute.xlu0 %923
        %v926 = vadd.f32 %v828, %v894
        %v927 = vadd.f32 %v829, %v894
        %v928 = vadd.f32 %v830, %v894
        %v929 = vadd.f32 %v831, %v894
        %v930 = vadd.f32 %v832, %v894
        %v931 = vadd.f32 %v833, %v894
        %v932 = vadd.f32 %v834, %v894
        %v933 = vadd.f32 %v835, %v894
        %v934 = vadd.f32 %v836, %v899
        %v935 = vadd.f32 %v837, %v899
        %v936 = vadd.f32 %v838, %v899
        %v937 = vadd.f32 %v839, %v899
        %v938 = vadd.f32 %v840, %v899
        %v939 = vadd.f32 %v841, %v899
        %v940 = vadd.f32 %v842, %v899
        %v941 = vadd.f32 %v843, %v899
        %v942 = vadd.f32 %v844, %v904
        %v943 = vadd.f32 %v845, %v904
        %v944 = vadd.f32 %v846, %v904
        %v945 = vadd.f32 %v847, %v904
        %v946 = vadd.f32 %v848, %v904
        %v947 = vadd.f32 %v849, %v904
        %v948 = vadd.f32 %v850, %v904
        %v949 = vadd.f32 %v851, %v904
        %v950 = vadd.f32 %v852, %v909
        %v951 = vadd.f32 %v853, %v909
        %v952 = vadd.f32 %v854, %v909
        %v953 = vadd.f32 %v855, %v909
        %v954 = vadd.f32 %v856, %v909
        %v955 = vadd.f32 %v857, %v909
        %v956 = vadd.f32 %v858, %v909
        %v957 = vadd.f32 %v859, %v909
        %v958 = vadd.f32 %v860, %v914
        %v959 = vadd.f32 %v861, %v914
        %v960 = vadd.f32 %v862, %v914
        %v961 = vadd.f32 %v863, %v914
        %v962 = vadd.f32 %v864, %v914
        %v963 = vadd.f32 %v865, %v914
        %v964 = vadd.f32 %v866, %v914
        %v965 = vadd.f32 %v867, %v914
        %v966 = vadd.f32 %v868, %v919
        %v967 = vadd.f32 %v869, %v919
        %v968 = vadd.f32 %v870, %v919
        %v969 = vadd.f32 %v871, %v919
        %v970 = vadd.f32 %v872, %v919
        %v971 = vadd.f32 %v873, %v919
        %v972 = vadd.f32 %v874, %v919
        %v973 = vadd.f32 %v875, %v919
        %v974 = vadd.f32 %v876, %v924
        %v975 = vadd.f32 %v877, %v924
        %v976 = vadd.f32 %v878, %v924
        %v977 = vadd.f32 %v879, %v924
        %v978 = vadd.f32 %v880, %v924
        %v979 = vadd.f32 %v881, %v924
        %v980 = vadd.f32 %v882, %v924
        %v981 = vadd.f32 %v883, %v924
        %v982 = vtanh.pop %v926
        %v983 = vtanh.pop %v927
        %v984 = vtanh.pop %v928
        %v985 = vtanh.pop %v929
        %v986 = vtanh.pop %v930
        %v987 = vtanh.pop %v931
        %v988 = vtanh.pop %v932
        %v989 = vtanh.pop %v933
        %v990 = vtanh.pop %v934
        %v991 = vtanh.pop %v935
        %v992 = vtanh.pop %v936
        %v993 = vtanh.pop %v937
        %v994 = vtanh.pop %v938
        %v995 = vtanh.pop %v939
        %v996 = vtanh.pop %v940
        %v997 = vtanh.pop %v941
        %v998 = vtanh.pop %v942
        %v999 = vtanh.pop %v943
        %v1000 = vtanh.pop %v944
        %v1001 = vtanh.pop %v945
        %v1002 = vtanh.pop %v946
        %v1003 = vtanh.pop %v947
        %v1004 = vtanh.pop %v948
        %v1005 = vtanh.pop %v949
        %v1006 = vtanh.pop %v950
        %v1007 = vtanh.pop %v951
        %v1008 = vtanh.pop %v952
        %v1009 = vtanh.pop %v953
        %v1010 = vtanh.pop %v954
        %v1011 = vtanh.pop %v955
        %v1012 = vtanh.pop %v956
        %v1013 = vtanh.pop %v957
        %v1014 = vtanh.pop %v958
        %v1015 = vtanh.pop %v959
        %v1016 = vtanh.pop %v960
        %v1017 = vtanh.pop %v961
        %v1018 = vtanh.pop %v962
        %v1019 = vtanh.pop %v963
        %v1020 = vtanh.pop %v964
        %v1021 = vtanh.pop %v965
        %v1022 = vtanh.pop %v966
        %v1023 = vtanh.pop %v967
        %v1024 = vtanh.pop %v968
        %v1025 = vtanh.pop %v969
        %v1026 = vtanh.pop %v970
        %v1027 = vtanh.pop %v971
        %v1028 = vtanh.pop %v972
        %v1029 = vtanh.pop %v973
        %v1030 = vtanh.pop %v974
        %v1031 = vtanh.pop %v975
        %v1032 = vtanh.pop %v976
        %v1033 = vtanh.pop %v977
        %v1034 = vtanh.pop %v978
        %v1035 = vtanh.pop %v979
        %v1036 = vtanh.pop %v980
        %v1037 = vtanh.pop %v981
        %v1038 = vld [vmem:[%s3] sm:$0xf]
        %v1039 = vld [vmem:[%s3 + $0x4] sm:$0xf]
        %v1040 = vld [vmem:[%s3 + $0x8] sm:$0xf]
        %v1041 = vld [vmem:[%s3 + $0xc] sm:$0xf]
        %v1042 = vld [vmem:[%s3 + $0x10] sm:$0xf]
        %v1043 = vld [vmem:[%s3 + $0x14] sm:$0xf]
        %v1044 = vld [vmem:[%s3 + $0x18] sm:$0x1]
        %v1045 = vpack.c.bf16 %v990, %v982
        %v1046 = vpack.c.bf16 %v991, %v983
        %v1047 = vpack.c.bf16 %v992, %v984
        %v1048 = vpack.c.bf16 %v993, %v985
        %v1049 = vpack.c.bf16 %v994, %v986
        %v1050 = vpack.c.bf16 %v995, %v987
        %v1051 = vpack.c.bf16 %v996, %v988
        %v1052 = vpack.c.bf16 %v997, %v989
        %v1053 = vpack.c.bf16 %v1006, %v998
        %v1054 = vpack.c.bf16 %v1007, %v999
        %v1055 = vpack.c.bf16 %v1008, %v1000
        %v1056 = vpack.c.bf16 %v1009, %v1001
        %v1057 = vpack.c.bf16 %v1010, %v1002
        %v1058 = vpack.c.bf16 %v1011, %v1003
        %v1059 = vpack.c.bf16 %v1012, %v1004
        %v1060 = vpack.c.bf16 %v1013, %v1005
        %v1061 = vpack.c.bf16 %v1022, %v1014
        %v1062 = vpack.c.bf16 %v1023, %v1015
        %v1063 = vpack.c.bf16 %v1024, %v1016
        %v1064 = vpack.c.bf16 %v1025, %v1017
        %v1065 = vpack.c.bf16 %v1026, %v1018
        %v1066 = vpack.c.bf16 %v1027, %v1019
        %v1067 = vpack.c.bf16 %v1028, %v1020
        %v1068 = vpack.c.bf16 %v1029, %v1021
        %v1069 = vpack.c.bf16 %v1030, %v1030
        %v1070 = vpack.c.bf16 %v1031, %v1031
        %v1071 = vpack.c.bf16 %v1032, %v1032
        %v1072 = vpack.c.bf16 %v1033, %v1033
        %v1073 = vpack.c.bf16 %v1034, %v1034
        %v1074 = vpack.c.bf16 %v1035, %v1035
        %v1075 = vpack.c.bf16 %v1036, %v1036
        %v1076 = vpack.c.bf16 %v1037, %v1037
        %v1077 = vld [vmem:[%s4] sm:$0xff]
        %v1078 = vld [vmem:[%s4 + $0x8] sm:$0xff]
        %v1079 = vld [vmem:[%s4 + $0x10] sm:$0xff]
        %v1080 = vld [vmem:[%s4 + $0x18] sm:$0xff]
        %v1081 = vld [vmem:[%s4 + $0x20] sm:$0xff]
        %v1082 = vld [vmem:[%s4 + $0x28] sm:$0xff]
        %v1083 = vld [vmem:[%s4 + $0x30] sm:$0x3]
        %1085 = vset.pattern.permute.xlu0 0
        %1086 = vperm.xlu0 %1085, %v1077
        %v1087 = vpop.permute.xlu0 %1086
        %1090 = vset.pattern.permute.xlu0 0
        %1091 = vperm.xlu0 %1090, %v1078
        %v1092 = vpop.permute.xlu0 %1091
        %1095 = vset.pattern.permute.xlu0 0
        %1096 = vperm.xlu0 %1095, %v1079
        %v1097 = vpop.permute.xlu0 %1096
        %1100 = vset.pattern.permute.xlu0 0
        %1101 = vperm.xlu0 %1100, %v1080
        %v1102 = vpop.permute.xlu0 %1101
        %1105 = vset.pattern.permute.xlu0 0
        %1106 = vperm.xlu0 %1105, %v1081
        %v1107 = vpop.permute.xlu0 %1106
        %1110 = vset.pattern.permute.xlu0 0
        %1111 = vperm.xlu0 %1110, %v1082
        %v1112 = vpop.permute.xlu0 %1111
        %1115 = vset.pattern.permute.xlu0 0
        %1116 = vperm.xlu0 %1115, %v1083
        %v1117 = vpop.permute.xlu0 %1116
        %v1126 = vunpack.c.l.b16 %v1038
        %v1127 = vunpack.c.l.b16 %v1039
        %v1128 = vunpack.c.l.b16 %v1040
        %v1129 = vunpack.c.l.b16 %v1041
        %v1130 = vunpack.c.l.b16 %v1042
        %v1131 = vunpack.c.l.b16 %v1043
        %v1132 = vunpack.c.l.b16 %v1044
        %v1133 = vpack.c.b16 %v1127, %v1126
        %v1134 = vpack.c.b16 %v1129, %v1128
        %v1135 = vpack.c.b16 %v1131, %v1130
        %v1136 = vpack.c.b16 %v1132, %v1132
        %vm1137 = vcmask 408576
        %v1139 = vsel %vm1137, %v1133, 0
        %v1142 = vsel %vm1137, %v1134, 0
        %v1145 = vsel %vm1137, %v1135, 0
        %v1148 = vsel %vm1137, %v1136, 0
        %vm1150 = vcmask 1040384
        %v1152 = vsel %vm1150, %v1069, 0
        %v1155 = vsel %vm1150, %v1070, 0
        %v1158 = vsel %vm1150, %v1071, 0
        %v1161 = vsel %vm1150, %v1072, 0
        %v1164 = vsel %vm1150, %v1073, 0
        %v1167 = vsel %vm1150, %v1074, 0
        %v1170 = vsel %vm1150, %v1075, 0
        %v1173 = vsel %vm1150, %v1076, 0
        %1175 = vmatprep.subr.bf16.mxu0 %v1046
        %1176 = vmatpush1.bf16.msra.mxu0 %v1045
        %1177 = vmatprep.subr.bf16.mxu0 %v1054
        %1178 = vmatpush1.bf16.msra.mxu0 %v1053
        %1179 = vmatprep.subr.bf16.mxu0 %v1062
        %1180 = vmatpush1.bf16.msra.mxu0 %v1061
        %1181 = vmatprep.subr.bf16.mxu0 %v1155
        %1182 = vmatpush1.bf16.msra.mxu0 %v1152
        %1183 = vmatprep.subr.bf16.mxu0 0
        %1184 = vmatpush1.bf16.msra.mxu0 0
        %1185 = vmatprep.subr.bf16.mxu0 0
        %1186 = vmatpush1.bf16.msra.mxu0 0
        %1187 = vmatprep.subr.bf16.mxu0 0
        %1188 = vmatpush1.bf16.msra.mxu0 0
        %1189 = vmatprep.subr.bf16.mxu0 0
        %1190 = vmatpush1.bf16.msra.mxu0 0
        %1191 = vmatprep.subr.bf16.mxu0 0
        %1192 = vmatpush1.bf16.msra.mxu0 0
        %1193 = vmatprep.subr.bf16.mxu0 0
        %1194 = vmatpush1.bf16.msra.mxu0 0
        %1195 = vmatprep.subr.bf16.mxu0 0
        %1196 = vmatpush1.bf16.msra.mxu0 0
        %1197 = vmatprep.subr.bf16.mxu0 0
        %1198 = vmatpush1.bf16.msra.mxu0 0
        %1199 = vmatprep.subr.bf16.mxu0 0
        %1200 = vmatpush1.bf16.msra.mxu0 0
        %1201 = vmatprep.subr.bf16.mxu0 0
        %1202 = vmatpush1.bf16.msra.mxu0 0
        %1203 = vmatprep.subr.bf16.mxu0 0
        %1204 = vmatpush1.bf16.msra.mxu0 0
        %1205 = vmatprep.subr.bf16.mxu0 0
        %1206 = vmatpush1.bf16.msra.mxu0 0
        %1207 = vmatprep.mubr.bf16.mxu0 0
        %1208 = vmatmul.mubr.bf16.gmra.mrb[0].mxu0 %v1139
        %v1209 = vpop.f32.mrb[0].mxu0
        %v1210 = vadd.f32 %v1087, %v1209
        %v1211 = vpop.f32.mrb[0].mxu0
        %v1212 = vadd.f32 %v1087, %v1211
        %v1213 = vpop.f32.mrb[0].mxu0
        %v1214 = vadd.f32 %v1092, %v1213
        %v1215 = vpop.f32.mrb[0].mxu0
        %v1216 = vadd.f32 %v1092, %v1215
        %1217 = vmatprep.mubr.bf16.mxu0 0
        %1218 = vmatmul.mubr.bf16.gmra.mrb[0].mxu0 %v1142
        %v1219 = vpop.f32.mrb[0].mxu0
        %v1220 = vadd.f32 %v1097, %v1219
        %v1221 = vpop.f32.mrb[0].mxu0
        %v1222 = vadd.f32 %v1097, %v1221
        %v1223 = vpop.f32.mrb[0].mxu0
        %v1224 = vadd.f32 %v1102, %v1223
        %v1225 = vpop.f32.mrb[0].mxu0
        %v1226 = vadd.f32 %v1102, %v1225
        %1227 = vmatprep.mubr.bf16.mxu0 0
        %1228 = vmatmul.mubr.bf16.gmra.mrb[0].mxu0 %v1145
        %v1229 = vpop.f32.mrb[0].mxu0
        %v1230 = vadd.f32 %v1107, %v1229
        %v1231 = vpop.f32.mrb[0].mxu0
        %v1232 = vadd.f32 %v1107, %v1231
        %v1233 = vpop.f32.mrb[0].mxu0
        %v1234 = vadd.f32 %v1112, %v1233
        %v1235 = vpop.f32.mrb[0].mxu0
        %v1236 = vadd.f32 %v1112, %v1235
        %1237 = vmatprep.mubr.bf16.mxu0 0
        %1238 = vmatmul.mubr.bf16.gmra.mrb[0].mxu0 %v1148
        %v1239 = vpop.f32.mrb[0].mxu0
        %v1240 = vadd.f32 %v1117, %v1239
        %v1241 = vpop.f32.mrb[0].mxu0
        %v1242 = vadd.f32 %v1117, %v1241
        %v1243 = vpop.f32.mrb[0].mxu0
        %v1244 = vpop.f32.mrb[0].mxu0
        %1245 = vdwg.mxu0
        %1246 = vmatprep.subr.bf16.mxu0 %v1048
        %1247 = vmatpush1.bf16.msra.mxu0 %v1047
        %1248 = vmatprep.subr.bf16.mxu0 %v1056
        %1249 = vmatpush1.bf16.msra.mxu0 %v1055
        %1250 = vmatprep.subr.bf16.mxu0 %v1064
        %1251 = vmatpush1.bf16.msra.mxu0 %v1063
        %1252 = vmatprep.subr.bf16.mxu0 %v1161
        %1253 = vmatpush1.bf16.msra.mxu0 %v1158
        %1254 = vmatprep.subr.bf16.mxu0 0
        %1255 = vmatpush1.bf16.msra.mxu0 0
        %1256 = vmatprep.subr.bf16.mxu0 0
        %1257 = vmatpush1.bf16.msra.mxu0 0
        %1258 = vmatprep.subr.bf16.mxu0 0
        %1259 = vmatpush1.bf16.msra.mxu0 0
        %1260 = vmatprep.subr.bf16.mxu0 0
        %1261 = vmatpush1.bf16.msra.mxu0 0
        %1262 = vmatprep.subr.bf16.mxu0 0
        %1263 = vmatpush1.bf16.msra.mxu0 0
        %1264 = vmatprep.subr.bf16.mxu0 0
        %1265 = vmatpush1.bf16.msra.mxu0 0
        %1266 = vmatprep.subr.bf16.mxu0 0
        %1267 = vmatpush1.bf16.msra.mxu0 0
        %1268 = vmatprep.subr.bf16.mxu0 0
        %1269 = vmatpush1.bf16.msra.mxu0 0
        %1270 = vmatprep.subr.bf16.mxu0 0
        %1271 = vmatpush1.bf16.msra.mxu0 0
        %1272 = vmatprep.subr.bf16.mxu0 0
        %1273 = vmatpush1.bf16.msra.mxu0 0
        %1274 = vmatprep.subr.bf16.mxu0 0
        %1275 = vmatpush1.bf16.msra.mxu0 0
        %1276 = vmatprep.subr.bf16.mxu0 0
        %1277 = vmatpush1.bf16.msra.mxu0 0
        %1278 = vmatprep.mubr.bf16.mxu0 0
        %1279 = vmatmul.mubr.bf16.gmra.mrb[0].mxu0 %v1139
        %v1280 = vpop.f32.mrb[0].mxu0
        %v1281 = vadd.f32 %v1087, %v1280
        %v1282 = vpop.f32.mrb[0].mxu0
        %v1283 = vadd.f32 %v1087, %v1282
        %v1284 = vpop.f32.mrb[0].mxu0
        %v1285 = vadd.f32 %v1092, %v1284
        %v1286 = vpop.f32.mrb[0].mxu0
        %v1287 = vadd.f32 %v1092, %v1286
        %1288 = vmatprep.mubr.bf16.mxu0 0
        %1289 = vmatmul.mubr.bf16.gmra.mrb[0].mxu0 %v1142
        %v1290 = vpop.f32.mrb[0].mxu0
        %v1291 = vadd.f32 %v1097, %v1290
        %v1292 = vpop.f32.mrb[0].mxu0
        %v1293 = vadd.f32 %v1097, %v1292
        %v1294 = vpop.f32.mrb[0].mxu0
        %v1295 = vadd.f32 %v1102, %v1294
        %v1296 = vpop.f32.mrb[0].mxu0
        %v1297 = vadd.f32 %v1102, %v1296
        %1298 = vmatprep.mubr.bf16.mxu0 0
        %1299 = vmatmul.mubr.bf16.gmra.mrb[0].mxu0 %v1145
        %v1300 = vpop.f32.mrb[0].mxu0
        %v1301 = vadd.f32 %v1107, %v1300
        %v1302 = vpop.f32.mrb[0].mxu0
        %v1303 = vadd.f32 %v1107, %v1302
        %v1304 = vpop.f32.mrb[0].mxu0
        %v1305 = vadd.f32 %v1112, %v1304
        %v1306 = vpop.f32.mrb[0].mxu0
        %v1307 = vadd.f32 %v1112, %v1306
        %1308 = vmatprep.mubr.bf16.mxu0 0
        %1309 = vmatmul.mubr.bf16.gmra.mrb[0].mxu0 %v1148
        %v1310 = vpop.f32.mrb[0].mxu0
        %v1311 = vadd.f32 %v1117, %v1310
        %v1312 = vpop.f32.mrb[0].mxu0
        %v1313 = vadd.f32 %v1117, %v1312
        %v1314 = vpop.f32.mrb[0].mxu0
        %v1315 = vpop.f32.mrb[0].mxu0
        %1316 = vdwg.mxu0
        %1317 = vmatprep.subr.bf16.mxu0 %v1050
        %1318 = vmatpush1.bf16.msra.mxu0 %v1049
        %1319 = vmatprep.subr.bf16.mxu0 %v1058
        %1320 = vmatpush1.bf16.msra.mxu0 %v1057
        %1321 = vmatprep.subr.bf16.mxu0 %v1066
        %1322 = vmatpush1.bf16.msra.mxu0 %v1065
        %1323 = vmatprep.subr.bf16.mxu0 %v1167
        %1324 = vmatpush1.bf16.msra.mxu0 %v1164
        %1325 = vmatprep.subr.bf16.mxu0 0
        %1326 = vmatpush1.bf16.msra.mxu0 0
        %1327 = vmatprep.subr.bf16.mxu0 0
        %1328 = vmatpush1.bf16.msra.mxu0 0
        %1329 = vmatprep.subr.bf16.mxu0 0
        %1330 = vmatpush1.bf16.msra.mxu0 0
        %1331 = vmatprep.subr.bf16.mxu0 0
        %1332 = vmatpush1.bf16.msra.mxu0 0
        %1333 = vmatprep.subr.bf16.mxu0 0
        %1334 = vmatpush1.bf16.msra.mxu0 0
        %1335 = vmatprep.subr.bf16.mxu0 0
        %1336 = vmatpush1.bf16.msra.mxu0 0
        %1337 = vmatprep.subr.bf16.mxu0 0
        %1338 = vmatpush1.bf16.msra.mxu0 0
        %1339 = vmatprep.subr.bf16.mxu0 0
        %1340 = vmatpush1.bf16.msra.mxu0 0
        %1341 = vmatprep.subr.bf16.mxu0 0
        %1342 = vmatpush1.bf16.msra.mxu0 0
        %1343 = vmatprep.subr.bf16.mxu0 0
        %1344 = vmatpush1.bf16.msra.mxu0 0
        %1345 = vmatprep.subr.bf16.mxu0 0
        %1346 = vmatpush1.bf16.msra.mxu0 0
        %1347 = vmatprep.subr.bf16.mxu0 0
        %1348 = vmatpush1.bf16.msra.mxu0 0
        %1349 = vmatprep.mubr.bf16.mxu0 0
        %1350 = vmatmul.mubr.bf16.gmra.mrb[0].mxu0 %v1139
        %v1351 = vpop.f32.mrb[0].mxu0
        %v1352 = vadd.f32 %v1087, %v1351
        %v1353 = vpop.f32.mrb[0].mxu0
        %v1354 = vadd.f32 %v1087, %v1353
        %v1355 = vpop.f32.mrb[0].mxu0
        %v1356 = vadd.f32 %v1092, %v1355
        %v1357 = vpop.f32.mrb[0].mxu0
        %v1358 = vadd.f32 %v1092, %v1357
        %1359 = vmatprep.mubr.bf16.mxu0 0
        %1360 = vmatmul.mubr.bf16.gmra.mrb[0].mxu0 %v1142
        %v1361 = vpop.f32.mrb[0].mxu0
        %v1362 = vadd.f32 %v1097, %v1361
        %v1363 = vpop.f32.mrb[0].mxu0
        %v1364 = vadd.f32 %v1097, %v1363
        %v1365 = vpop.f32.mrb[0].mxu0
        %v1366 = vadd.f32 %v1102, %v1365
        %v1367 = vpop.f32.mrb[0].mxu0
        %v1368 = vadd.f32 %v1102, %v1367
        %1369 = vmatprep.mubr.bf16.mxu0 0
        %1370 = vmatmul.mubr.bf16.gmra.mrb[0].mxu0 %v1145
        %v1371 = vpop.f32.mrb[0].mxu0
        %v1372 = vadd.f32 %v1107, %v1371
        %v1373 = vpop.f32.mrb[0].mxu0
        %v1374 = vadd.f32 %v1107, %v1373
        %v1375 = vpop.f32.mrb[0].mxu0
        %v1376 = vadd.f32 %v1112, %v1375
        %v1377 = vpop.f32.mrb[0].mxu0
        %v1378 = vadd.f32 %v1112, %v1377
        %1379 = vmatprep.mubr.bf16.mxu0 0
        %1380 = vmatmul.mubr.bf16.gmra.mrb[0].mxu0 %v1148
        %v1381 = vpop.f32.mrb[0].mxu0
        %v1382 = vadd.f32 %v1117, %v1381
        %v1383 = vpop.f32.mrb[0].mxu0
        %v1384 = vadd.f32 %v1117, %v1383
        %v1385 = vpop.f32.mrb[0].mxu0
        %v1386 = vpop.f32.mrb[0].mxu0
        %1387 = vdwg.mxu0
        %1388 = vmatprep.subr.bf16.mxu0 %v1052
        %1389 = vmatpush1.bf16.msra.mxu0 %v1051
        %1390 = vmatprep.subr.bf16.mxu0 %v1060
        %1391 = vmatpush1.bf16.msra.mxu0 %v1059
        %1392 = vmatprep.subr.bf16.mxu0 %v1068
        %1393 = vmatpush1.bf16.msra.mxu0 %v1067
        %1394 = vmatprep.subr.bf16.mxu0 %v1173
        %1395 = vmatpush1.bf16.msra.mxu0 %v1170
        %1396 = vmatprep.subr.bf16.mxu0 0
        %1397 = vmatpush1.bf16.msra.mxu0 0
        %1398 = vmatprep.subr.bf16.mxu0 0
        %1399 = vmatpush1.bf16.msra.mxu0 0
        %1400 = vmatprep.subr.bf16.mxu0 0
        %1401 = vmatpush1.bf16.msra.mxu0 0
        %1402 = vmatprep.subr.bf16.mxu0 0
        %1403 = vmatpush1.bf16.msra.mxu0 0
        %1404 = vmatprep.subr.bf16.mxu0 0
        %1405 = vmatpush1.bf16.msra.mxu0 0
        %1406 = vmatprep.subr.bf16.mxu0 0
        %1407 = vmatpush1.bf16.msra.mxu0 0
        %1408 = vmatprep.subr.bf16.mxu0 0
        %1409 = vmatpush1.bf16.msra.mxu0 0
        %1410 = vmatprep.subr.bf16.mxu0 0
        %1411 = vmatpush1.bf16.msra.mxu0 0
        %1412 = vmatprep.subr.bf16.mxu0 0
        %1413 = vmatpush1.bf16.msra.mxu0 0
        %1414 = vmatprep.subr.bf16.mxu0 0
        %1415 = vmatpush1.bf16.msra.mxu0 0
        %1416 = vmatprep.subr.bf16.mxu0 0
        %1417 = vmatpush1.bf16.msra.mxu0 0
        %1418 = vmatprep.subr.bf16.mxu0 0
        %1419 = vmatpush1.bf16.msra.mxu0 0
        %1420 = vmatprep.mubr.bf16.mxu0 0
        %1421 = vmatmul.mubr.bf16.gmra.mrb[0].mxu0 %v1139
        %v1422 = vpop.f32.mrb[0].mxu0
        %v1423 = vadd.f32 %v1087, %v1422
        %v1424 = vpop.f32.mrb[0].mxu0
        %v1425 = vadd.f32 %v1087, %v1424
        %v1426 = vpop.f32.mrb[0].mxu0
        %v1427 = vadd.f32 %v1092, %v1426
        %v1428 = vpop.f32.mrb[0].mxu0
        %v1429 = vadd.f32 %v1092, %v1428
        %1430 = vmatprep.mubr.bf16.mxu0 0
        %1431 = vmatmul.mubr.bf16.gmra.mrb[0].mxu0 %v1142
        %v1432 = vpop.f32.mrb[0].mxu0
        %v1433 = vadd.f32 %v1097, %v1432
        %v1434 = vpop.f32.mrb[0].mxu0
        %v1435 = vadd.f32 %v1097, %v1434
        %v1436 = vpop.f32.mrb[0].mxu0
        %v1437 = vadd.f32 %v1102, %v1436
        %v1438 = vpop.f32.mrb[0].mxu0
        %v1439 = vadd.f32 %v1102, %v1438
        %1440 = vmatprep.mubr.bf16.mxu0 0
        %1441 = vmatmul.mubr.bf16.gmra.mrb[0].mxu0 %v1145
        %v1442 = vpop.f32.mrb[0].mxu0
        %v1443 = vadd.f32 %v1107, %v1442
        %v1444 = vpop.f32.mrb[0].mxu0
        %v1445 = vadd.f32 %v1107, %v1444
        %v1446 = vpop.f32.mrb[0].mxu0
        %v1447 = vadd.f32 %v1112, %v1446
        %v1448 = vpop.f32.mrb[0].mxu0
        %v1449 = vadd.f32 %v1112, %v1448
        %1450 = vmatprep.mubr.bf16.mxu0 0
        %1451 = vmatmul.mubr.bf16.gmra.mrb[0].mxu0 %v1148
        %v1452 = vpop.f32.mrb[0].mxu0
        %v1453 = vadd.f32 %v1117, %v1452
        %v1454 = vpop.f32.mrb[0].mxu0
        %v1455 = vadd.f32 %v1117, %v1454
        %v1456 = vpop.f32.mrb[0].mxu0
        %v1457 = vpop.f32.mrb[0].mxu0
        %1458 = vdwg.mxu0
        %v1459 = vtanh.pop %v1210
        %v1460 = vtanh.pop %v1212
        %v1461 = vtanh.pop %v1281
        %v1462 = vtanh.pop %v1283
        %v1463 = vtanh.pop %v1352
        %v1464 = vtanh.pop %v1354
        %v1465 = vtanh.pop %v1423
        %v1466 = vtanh.pop %v1425
        %v1467 = vtanh.pop %v1214
        %v1468 = vtanh.pop %v1216
        %v1469 = vtanh.pop %v1285
        %v1470 = vtanh.pop %v1287
        %v1471 = vtanh.pop %v1356
        %v1472 = vtanh.pop %v1358
        %v1473 = vtanh.pop %v1427
        %v1474 = vtanh.pop %v1429
        %v1475 = vtanh.pop %v1220
        %v1476 = vtanh.pop %v1222
        %v1477 = vtanh.pop %v1291
        %v1478 = vtanh.pop %v1293
        %v1479 = vtanh.pop %v1362
        %v1480 = vtanh.pop %v1364
        %v1481 = vtanh.pop %v1433
        %v1482 = vtanh.pop %v1435
        %v1483 = vtanh.pop %v1224
        %v1484 = vtanh.pop %v1226
        %v1485 = vtanh.pop %v1295
        %v1486 = vtanh.pop %v1297
        %v1487 = vtanh.pop %v1366
        %v1488 = vtanh.pop %v1368
        %v1489 = vtanh.pop %v1437
        %v1490 = vtanh.pop %v1439
        %v1491 = vtanh.pop %v1230
        %v1492 = vtanh.pop %v1232
        %v1493 = vtanh.pop %v1301
        %v1494 = vtanh.pop %v1303
        %v1495 = vtanh.pop %v1372
        %v1496 = vtanh.pop %v1374
        %v1497 = vtanh.pop %v1443
        %v1498 = vtanh.pop %v1445
        %v1499 = vtanh.pop %v1234
        %v1500 = vtanh.pop %v1236
        %v1501 = vtanh.pop %v1305
        %v1502 = vtanh.pop %v1307
        %v1503 = vtanh.pop %v1376
        %v1504 = vtanh.pop %v1378
        %v1505 = vtanh.pop %v1447
        %v1506 = vtanh.pop %v1449
        %v1507 = vtanh.pop %v1240
        %v1508 = vtanh.pop %v1242
        %v1509 = vtanh.pop %v1311
        %v1510 = vtanh.pop %v1313
        %v1511 = vtanh.pop %v1382
        %v1512 = vtanh.pop %v1384
        %v1513 = vtanh.pop %v1453
        %v1514 = vtanh.pop %v1455
        %v1515 = vld [vmem:[%s5] sm:$0xff]
        %v1516 = vld [vmem:[%s5 + $0x8] sm:$0xff]
        %v1517 = vld [vmem:[%s5 + $0x10] sm:$0xff]
        %v1518 = vld [vmem:[%s5 + $0x18] sm:$0xff]
        %v1519 = vld [vmem:[%s5 + $0x20] sm:$0xff]
        %v1520 = vld [vmem:[%s5 + $0x28] sm:$0xff]
        %v1521 = vld [vmem:[%s5 + $0x30] sm:$0x3]
        %1523 = vset.pattern.permute.xlu0 0
        %1524 = vperm.xlu0 %1523, %v1515
        %v1525 = vpop.permute.xlu0 %1524
        %1528 = vset.pattern.permute.xlu0 0
        %1529 = vperm.xlu0 %1528, %v1516
        %v1530 = vpop.permute.xlu0 %1529
        %1533 = vset.pattern.permute.xlu0 0
        %1534 = vperm.xlu0 %1533, %v1517
        %v1535 = vpop.permute.xlu0 %1534
        %1538 = vset.pattern.permute.xlu0 0
        %1539 = vperm.xlu0 %1538, %v1518
        %v1540 = vpop.permute.xlu0 %1539
        %1543 = vset.pattern.permute.xlu0 0
        %1544 = vperm.xlu0 %1543, %v1519
        %v1545 = vpop.permute.xlu0 %1544
        %1548 = vset.pattern.permute.xlu0 0
        %1549 = vperm.xlu0 %1548, %v1520
        %v1550 = vpop.permute.xlu0 %1549
        %1553 = vset.pattern.permute.xlu0 0
        %1554 = vperm.xlu0 %1553, %v1521
        %v1555 = vpop.permute.xlu0 %1554
        %v1557 = vmul.f32 %v1459, %v1525
        %v1558 = vmul.f32 %v1460, %v1525
        %v1559 = vmul.f32 %v1461, %v1525
        %v1560 = vmul.f32 %v1462, %v1525
        %v1561 = vmul.f32 %v1463, %v1525
        %v1562 = vmul.f32 %v1464, %v1525
        %v1563 = vmul.f32 %v1465, %v1525
        %v1564 = vmul.f32 %v1466, %v1525
        %v1565 = vmul.f32 %v1467, %v1530
        %v1566 = vmul.f32 %v1468, %v1530
        %v1567 = vmul.f32 %v1469, %v1530
        %v1568 = vmul.f32 %v1470, %v1530
        %v1569 = vmul.f32 %v1471, %v1530
        %v1570 = vmul.f32 %v1472, %v1530
        %v1571 = vmul.f32 %v1473, %v1530
        %v1572 = vmul.f32 %v1474, %v1530
        %v1573 = vmul.f32 %v1475, %v1535
        %v1574 = vmul.f32 %v1476, %v1535
        %v1575 = vmul.f32 %v1477, %v1535
        %v1576 = vmul.f32 %v1478, %v1535
        %v1577 = vmul.f32 %v1479, %v1535
        %v1578 = vmul.f32 %v1480, %v1535
        %v1579 = vmul.f32 %v1481, %v1535
        %v1580 = vmul.f32 %v1482, %v1535
        %v1581 = vmul.f32 %v1483, %v1540
        %v1582 = vmul.f32 %v1484, %v1540
        %v1583 = vmul.f32 %v1485, %v1540
        %v1584 = vmul.f32 %v1486, %v1540
        %v1585 = vmul.f32 %v1487, %v1540
        %v1586 = vmul.f32 %v1488, %v1540
        %v1587 = vmul.f32 %v1489, %v1540
        %v1588 = vmul.f32 %v1490, %v1540
        %v1589 = vmul.f32 %v1491, %v1545
        %v1590 = vmul.f32 %v1492, %v1545
        %v1591 = vmul.f32 %v1493, %v1545
        %v1592 = vmul.f32 %v1494, %v1545
        %v1593 = vmul.f32 %v1495, %v1545
        %v1594 = vmul.f32 %v1496, %v1545
        %v1595 = vmul.f32 %v1497, %v1545
        %v1596 = vmul.f32 %v1498, %v1545
        %v1597 = vmul.f32 %v1499, %v1550
        %v1598 = vmul.f32 %v1500, %v1550
        %v1599 = vmul.f32 %v1501, %v1550
        %v1600 = vmul.f32 %v1502, %v1550
        %v1601 = vmul.f32 %v1503, %v1550
        %v1602 = vmul.f32 %v1504, %v1550
        %v1603 = vmul.f32 %v1505, %v1550
        %v1604 = vmul.f32 %v1506, %v1550
        %v1605 = vmul.f32 %v1507, %v1555
        %v1606 = vmul.f32 %v1508, %v1555
        %v1607 = vmul.f32 %v1509, %v1555
        %v1608 = vmul.f32 %v1510, %v1555
        %v1609 = vmul.f32 %v1511, %v1555
        %v1610 = vmul.f32 %v1512, %v1555
        %v1611 = vmul.f32 %v1513, %v1555
        %v1612 = vmul.f32 %v1514, %v1555
        %v1613 = vadd.f32 %v1557, %v1565
        %v1614 = vadd.f32 %v1613, %v1573
        %v1615 = vadd.f32 %v1614, %v1581
        %v1616 = vadd.f32 %v1615, %v1589
        %v1617 = vadd.f32 %v1616, %v1597
        %vm1618 = vcmask 1041408
        %v1619 = vsel %vm1618, %v1605, 0.0
        %v1620 = vadd.f32 %v1617, %v1619
        %v1621 = vrot.slane %v1620, 4
        %v1622 = vadd.f32 %v1620, %v1621
        %v1623 = vrot.slane %v1622, 2
        %v1624 = vadd.f32 %v1622, %v1623
        %v1625 = vrot.slane %v1624, 1
        %v1626 = vadd.f32 %v1624, %v1625
        %v1627 = vadd.f32 %v1558, %v1566
        %v1628 = vadd.f32 %v1627, %v1574
        %v1629 = vadd.f32 %v1628, %v1582
        %v1630 = vadd.f32 %v1629, %v1590
        %v1631 = vadd.f32 %v1630, %v1598
        %v1632 = vsel %vm1618, %v1606, 0.0
        %v1633 = vadd.f32 %v1631, %v1632
        %v1634 = vrot.slane %v1633, 4
        %v1635 = vadd.f32 %v1633, %v1634
        %v1636 = vrot.slane %v1635, 2
        %v1637 = vadd.f32 %v1635, %v1636
        %v1638 = vrot.slane %v1637, 1
        %v1639 = vadd.f32 %v1637, %v1638
        %v1640 = vadd.f32 %v1559, %v1567
        %v1641 = vadd.f32 %v1640, %v1575
        %v1642 = vadd.f32 %v1641, %v1583
        %v1643 = vadd.f32 %v1642, %v1591
        %v1644 = vadd.f32 %v1643, %v1599
        %v1645 = vsel %vm1618, %v1607, 0.0
        %v1646 = vadd.f32 %v1644, %v1645
        %v1647 = vrot.slane %v1646, 4
        %v1648 = vadd.f32 %v1646, %v1647
        %v1649 = vrot.slane %v1648, 2
        %v1650 = vadd.f32 %v1648, %v1649
        %v1651 = vrot.slane %v1650, 1
        %v1652 = vadd.f32 %v1650, %v1651
        %v1653 = vadd.f32 %v1560, %v1568
        %v1654 = vadd.f32 %v1653, %v1576
        %v1655 = vadd.f32 %v1654, %v1584
        %v1656 = vadd.f32 %v1655, %v1592
        %v1657 = vadd.f32 %v1656, %v1600
        %v1658 = vsel %vm1618, %v1608, 0.0
        %v1659 = vadd.f32 %v1657, %v1658
        %v1660 = vrot.slane %v1659, 4
        %v1661 = vadd.f32 %v1659, %v1660
        %v1662 = vrot.slane %v1661, 2
        %v1663 = vadd.f32 %v1661, %v1662
        %v1664 = vrot.slane %v1663, 1
        %v1665 = vadd.f32 %v1663, %v1664
        %v1666 = vadd.f32 %v1561, %v1569
        %v1667 = vadd.f32 %v1666, %v1577
        %v1668 = vadd.f32 %v1667, %v1585
        %v1669 = vadd.f32 %v1668, %v1593
        %v1670 = vadd.f32 %v1669, %v1601
        %v1671 = vsel %vm1618, %v1609, 0.0
        %v1672 = vadd.f32 %v1670, %v1671
        %v1673 = vrot.slane %v1672, 4
        %v1674 = vadd.f32 %v1672, %v1673
        %v1675 = vrot.slane %v1674, 2
        %v1676 = vadd.f32 %v1674, %v1675
        %v1677 = vrot.slane %v1676, 1
        %v1678 = vadd.f32 %v1676, %v1677
        %v1679 = vadd.f32 %v1562, %v1570
        %v1680 = vadd.f32 %v1679, %v1578
        %v1681 = vadd.f32 %v1680, %v1586
        %v1682 = vadd.f32 %v1681, %v1594
        %v1683 = vadd.f32 %v1682, %v1602
        %v1684 = vsel %vm1618, %v1610, 0.0
        %v1685 = vadd.f32 %v1683, %v1684
        %v1686 = vrot.slane %v1685, 4
        %v1687 = vadd.f32 %v1685, %v1686
        %v1688 = vrot.slane %v1687, 2
        %v1689 = vadd.f32 %v1687, %v1688
        %v1690 = vrot.slane %v1689, 1
        %v1691 = vadd.f32 %v1689, %v1690
        %v1692 = vadd.f32 %v1563, %v1571
        %v1693 = vadd.f32 %v1692, %v1579
        %v1694 = vadd.f32 %v1693, %v1587
        %v1695 = vadd.f32 %v1694, %v1595
        %v1696 = vadd.f32 %v1695, %v1603
        %v1697 = vsel %vm1618, %v1611, 0.0
        %v1698 = vadd.f32 %v1696, %v1697
        %v1699 = vrot.slane %v1698, 4
        %v1700 = vadd.f32 %v1698, %v1699
        %v1701 = vrot.slane %v1700, 2
        %v1702 = vadd.f32 %v1700, %v1701
        %v1703 = vrot.slane %v1702, 1
        %v1704 = vadd.f32 %v1702, %v1703
        %v1705 = vadd.f32 %v1564, %v1572
        %v1706 = vadd.f32 %v1705, %v1580
        %v1707 = vadd.f32 %v1706, %v1588
        %v1708 = vadd.f32 %v1707, %v1596
        %v1709 = vadd.f32 %v1708, %v1604
        %v1710 = vsel %vm1618, %v1612, 0.0
        %v1711 = vadd.f32 %v1709, %v1710
        %v1712 = vrot.slane %v1711, 4
        %v1713 = vadd.f32 %v1711, %v1712
        %v1714 = vrot.slane %v1713, 2
        %v1715 = vadd.f32 %v1713, %v1714
        %v1716 = vrot.slane %v1715, 1
        %v1717 = vadd.f32 %v1715, %v1716
        %s1718 = sld [smem:[#allocation2]]
        %v1719 = vstv %s1718
        %v1720 = vadd.f32 %v1626, %v1719
        %v1721 = vadd.f32 %v1639, %v1719
        %v1722 = vadd.f32 %v1652, %v1719
        %v1723 = vadd.f32 %v1665, %v1719
        %v1724 = vadd.f32 %v1678, %v1719
        %v1725 = vadd.f32 %v1691, %v1719
        %v1726 = vadd.f32 %v1704, %v1719
        %v1727 = vadd.f32 %v1717, %v1719
        %v1736 = vcombine.low %v1720, %v1721
        %v1737 = vcombine.low %v1722, %v1723
        %v1738 = vcombine.low %v1724, %v1725
        %v1739 = vcombine.low %v1726, %v1727
        %v1741 = vunpack.c.l.s4 1966171168
        %v1742 = vunpack.c.0.s8 %v1741
        %v1743 = vlaneseq
        %v1744 = vshrl.u32 %v1743, 7
        %v1745 = vsub.s32 %v1742, %v1744
        %v1746 = vrot.slane %v1736, %v1745
        %v1748 = vunpack.c.l.s4 1966171168
        %v1749 = vunpack.c.0.s8 %v1748
        %v1750 = vlaneseq
        %v1751 = vshrl.u32 %v1750, 7
        %v1752 = vsub.s32 %v1749, %v1751
        %v1753 = vrot.slane %v1737, %v1752
        %v1755 = vunpack.c.l.s4 1966171168
        %v1756 = vunpack.c.0.s8 %v1755
        %v1757 = vlaneseq
        %v1758 = vshrl.u32 %v1757, 7
        %v1759 = vsub.s32 %v1756, %v1758
        %v1760 = vrot.slane %v1738, %v1759
        %v1762 = vunpack.c.l.s4 1966171168
        %v1763 = vunpack.c.0.s8 %v1762
        %v1764 = vlaneseq
        %v1765 = vshrl.u32 %v1764, 7
        %v1766 = vsub.s32 %v1763, %v1765
        %v1767 = vrot.slane %v1739, %v1766
        %v1768 = vcombine.low %v1746, %v1753
        %v1769 = vcombine.low %v1760, %v1767
        %v1771 = vunpack.c.l.s4 1966171168
        %v1772 = vunpack.c.0.s8 %v1771
        %v1773 = vlaneseq
        %v1774 = vshrl.u32 %v1773, 7
        %v1775 = vsub.s32 %v1772, %v1774
        %v1776 = vrot.slane %v1768, %v1775
        %v1778 = vunpack.c.l.s4 1966171168
        %v1779 = vunpack.c.0.s8 %v1778
        %v1780 = vlaneseq
        %v1781 = vshrl.u32 %v1780, 7
        %v1782 = vsub.s32 %v1779, %v1781
        %v1783 = vrot.slane %v1769, %v1782
        %v1784 = vcombine.low %v1776, %v1783
        %1786 = vst [vmem:[%s273] sm:$0xff] %v1784
        %s1787 = sand.u32 %s182, 1
        %s1788 = scalar_lea.sflag [#allocation4], %s1787
        %s1789 = sand.u32 %s182, 1
        %s1790 = smul.addr %s1789, 8
        %s1791 = scalar_lea.vmem [#allocation3], %s1790
        // Predicated region
        $region49: #{pinn_2dwave_forward.1} parent=47 // pred_check
          %p1792 = pneg %p192
        $region50: #{pinn_2dwave_forward.1} parent=47 // pred_check_branch
          %1794 = sbr.rel (%p1792) target = $region52
        $region51: #{pinn_2dwave_forward.1} parent=47 // pred_region
          %s1795 = smul.u32 8, %s22
          %s1797 = ssub.s32 128, 128
          %1798 = vsyncadd %s1788, %s1797
          %s1799 = smul.addr %s1795, 16
          %s1800 = scalar_lea.hbm %s7, %s1799
          %s1802 = sshll.u32 %s1791, 4
          %s1803 = int_to_ptr.vmem [resolvable:$true] %s1802
          %1805 = dma.vmem_to_hbm [thread:$0]  %s1803, 128, %s1800, %s1788
        $region52: #{pinn_2dwave_forward.1} parent=47 // pred_fallthru
          _
      $region48: #{pinn_2dwave_forward.1} parent=5 // pred_fallthru
        _
      %p1806 = scmp.le.s32.totalorder 2, %s17
      // Predicated region
      $region53: #{pinn_2dwave_forward.1} parent=5 // pred_check
        %p1807 = pneg %p1806
      $region54: #{pinn_2dwave_forward.1} parent=5 // pred_check_branch
        %1809 = sbr.rel (%p1807) target = $region56
      $region55: #{pinn_2dwave_forward.1} parent=5 // pred_region
        %s1810 = ssub.s32 %s17, 2
        // Predicated region
        $region57: #{pinn_2dwave_forward.1} parent=55 // pred_check
          %p1811 = pneg %p198
        $region58: #{pinn_2dwave_forward.1} parent=55 // pred_check_branch
          %1813 = sbr.rel (%p1811) target = $region60
        $region59: #{pinn_2dwave_forward.1} parent=55 // pred_region
          %s1814 = sand.u32 %s183, 1
          %s1815 = scalar_lea.sflag [#allocation4], %s1814
          %s1816 = sand.u32 %s183, 1
          %s1817 = smul.addr %s1816, 8
          %s1818 = scalar_lea.vmem [#allocation3], %s1817
          %1819 = dma.done %s1815, 128
        $region60: #{pinn_2dwave_forward.1} parent=55 // pred_fallthru
          _
      $region56: #{pinn_2dwave_forward.1} parent=5 // pred_fallthru
        _
    $region6: #{pinn_2dwave_forward.1} parent=1 // loop_footer
      %s21 = sadd.s32 1, %s17
    $region7: #{pinn_2dwave_forward.1} parent=1 // loop_footer_branch
      %16 = sbr.rel target = $region3
    $region8: #{pinn_2dwave_forward.1} parent=1 // loop_exit
      _
    %1820 = vsyncpa [#allocation4], 1
    %s1821 = scalar_lea.sflag [#allocation4], 1
    %1822 = vsyncpa %s1821, 1

</llo_original>
